<compile_context>
chip_gen: v7x
topology: tpu7x:2x2x1
jax: 0.10.0
libtpu: 0.0.40
codegen_flags: <defaults>
</compile_context>

<pallas_src>
import functools

import jax
import jax.numpy as jnp
from jax.experimental import pallas as pl
from jax.experimental.pallas import tpu as pltpu

_HIDDEN = 256
_LANE = 128
_MAX_TILE_B = 256  # batch tile when B is large (MXU-friendly, fits VMEM everywhere)


def _leaky_relu(x, slope=0.2):
    return jnp.where(x > 0, x, slope * x)


def generator_kernel(z_ref, w1_ref, w_mid_ref, w6_ref, b15_ref, b6_ref, out_ref):
    """Whole-network MLP for one batch tile. Everything fits in VMEM at these sizes.

    z / weights arrive as bf16 (MXU-native); biases are f32; all post-matmul math
    (bias add, LeakyReLU, tanh) is f32 and the activation is cast back to bf16
    before the next matmul.
    """
    h = z_ref[...]  # bf16 [tile_b, K_padded]

    # Layer 1: Linear + LeakyReLU(0.2). Dropout = identity in eval mode.
    # TODO(synk): training-mode dropout (p=0.2 / 0.25) not implemented; forward uses eval semantics.
    acc = jnp.dot(h, w1_ref[...], preferred_element_type=jnp.float32) + b15_ref[0:1, :]
    h = _leaky_relu(acc).astype(jnp.bfloat16)

    # Layers 2..5: stacked [4, 256, 256] weights, stacked [5, 256] biases.
    for i in range(4):
        acc = jnp.dot(h, w_mid_ref[i], preferred_element_type=jnp.float32) \
            + b15_ref[i + 1:i + 2, :]
        h = _leaky_relu(acc).astype(jnp.bfloat16)

    # Output layer: Linear + Tanh (lane-padded output columns are tanh(0)=0, sliced off).
    y = jnp.dot(h, w6_ref[...], preferred_element_type=jnp.float32) + b6_ref[...]
    out_ref[...] = jnp.tanh(y).astype(out_ref.dtype)


def prepare_generator_params(params):
    """One-time pad + cast of the 6 (W, b) tuples. Hoisted out of the forward path.

    Args:
      params: list of 6 (W, b); W: [in, out] f32, b: [1, out] f32.

    Returns:
      (prepped, noise_dim, image_dim) where prepped is the tuple of kernel operands.
    """
    (w1, b1), (w2, b2), (w3, b3), (w4, b4), (w5, b5), (w6, b6) = params
    noise_dim = w1.shape[0]
    image_dim = w6.shape[1]
    k_pad = (-noise_dim) % _LANE   # pad noise dim to a lane multiple (64 -> 128)
    n_pad = (-image_dim) % _LANE   # pad output dim to a lane multiple (784 -> 896)

    w1_p = jnp.pad(w1, ((0, k_pad), (0, 0))).astype(jnp.bfloat16)          # [Kp, 256]
    w_mid = jnp.stack([w2, w3, w4, w5]).astype(jnp.bfloat16)               # [4, 256, 256]
    w6_p = jnp.pad(w6, ((0, 0), (0, n_pad))).astype(jnp.bfloat16)          # [256, Np]
    b15 = jnp.concatenate([b1, b2, b3, b4, b5], axis=0).astype(jnp.float32)  # [5, 256]
    b6_p = jnp.pad(b6, ((0, 0), (0, n_pad))).astype(jnp.float32)           # [1, Np]

    prepped = (w1_p, w_mid, w6_p, b15, b6_p)
    return prepped, noise_dim, image_dim


@functools.partial(jax.jit, static_argnums=(2, 3))
def _generator_forward_impl(z, prepped, noise_dim, image_dim):
    w1_p, w_mid, w6_p, b15, b6_p = prepped
    B = z.shape[0]
    k_padded = w1_p.shape[0]
    out_padded = w6_p.shape[1]
    n_hidden = w1_p.shape[1]

    # Pad noise features to the lane-padded K and cast to bf16 (MXU native).
    z_p = jnp.pad(z, ((0, 0), (0, k_padded - noise_dim))).astype(jnp.bfloat16)

    # Batch tiling: single tile for small B, 256-row tiles (parallel grid) for large B.
    if B <= _MAX_TILE_B:
        tile_b, b_padded = B, B
    else:
        tile_b = _MAX_TILE_B
        b_padded = ((B + tile_b - 1) // tile_b) * tile_b
    if b_padded != B:
        z_p = jnp.pad(z_p, ((0, b_padded - B), (0, 0)))
    grid = (b_padded // tile_b,)

    out = pl.pallas_call(
        generator_kernel,
        out_shape=jax.ShapeDtypeStruct((b_padded, out_padded), jnp.float32),
        grid=grid,
        in_specs=[
            pl.BlockSpec((tile_b, k_padded), lambda i: (i, 0)),            # z tile
            pl.BlockSpec((k_padded, n_hidden), lambda i: (0, 0)),          # w1 (resident)
            pl.BlockSpec((4, n_hidden, n_hidden), lambda i: (0, 0, 0)),    # w2..w5 (resident)
            pl.BlockSpec((n_hidden, out_padded), lambda i: (0, 0)),        # w6 (resident)
            pl.BlockSpec((5, n_hidden), lambda i: (0, 0)),                 # b1..b5 (resident)
            pl.BlockSpec((1, out_padded), lambda i: (0, 0)),               # b6 (resident)
        ],
        out_specs=pl.BlockSpec((tile_b, out_padded), lambda i: (i, 0)),
        compiler_params=pltpu.CompilerParams(
            dimension_semantics=("parallel",),
            vmem_limit_bytes=16 << 20,
        ),
    )(z_p, w1_p, w_mid, w6_p, b15, b6_p)

    return out[:B, :image_dim]


def make_generator(params):
    """Returns a jitted forward(z) with params prepared (padded/cast) exactly once."""
    prepped, noise_dim, image_dim = prepare_generator_params(params)
    prepped = jax.tree_util.tree_map(jax.device_put, prepped)

    def forward(z):
        return _generator_forward_impl(z, prepped, noise_dim, image_dim)

    return forward


def init_generator_params(key, noise_dim, image_dim, hidden=_HIDDEN):
    """Deterministic synthetic parameter init (PyTorch-Linear-like uniform)."""
    dims = [noise_dim, hidden, hidden, hidden, hidden, hidden, image_dim]
    params = []
    for i in range(6):
        fan_in, fan_out = dims[i], dims[i + 1]
        key, kw, kb = jax.random.split(key, 3)
        bound = 1.0 / (fan_in ** 0.5)
        w = jax.random.uniform(kw, (fan_in, fan_out), jnp.float32, -bound, bound)
        b = jax.random.uniform(kb, (1, fan_out), jnp.float32, -bound, bound)
        params.append((w, b))
    return params


def generator_reference_f32(z, params):
    """Pure-JAX f32 reference (exact PyTorch eval-mode semantics)."""
    h = z
    for i, (w, b) in enumerate(params):
        h = h @ w + b
        if i < 5:
            h = jnp.where(h > 0, h, 0.2 * h)
        else:
            h = jnp.tanh(h)
    return h


def generator_reference_bf16(z, params):
    """Pure-JAX reference mimicking the kernel's bf16-matmul / f32-accumulate numerics."""
    h = z.astype(jnp.bfloat16)
    for i, (w, b) in enumerate(params):
        acc = jnp.dot(h, w.astype(jnp.bfloat16),
                      preferred_element_type=jnp.float32) + b.astype(jnp.float32)
        if i < 5:
            h = jnp.where(acc > 0, acc, 0.2 * acc).astype(jnp.bfloat16)
        else:
            h = jnp.tanh(acc)
    return h


if __name__ == "__main__":
    noise_dim = 64
    image_dim = 28 * 28  # 784, Fashion-MNIST style
    batch = 8

    key = jax.random.PRNGKey(0)
    key, kz = jax.random.split(key)
    z = jax.random.normal(kz, (batch, noise_dim), dtype=jnp.float32)

    params = init_generator_params(key, noise_dim, image_dim)

    forward = make_generator(params)   # one-time pad/cast, jitted forward
    out = forward(z)
    out = jax.block_until_ready(out)
    assert out.shape == (batch, image_dim), out.shape

    # Tight check vs. a reference using the same bf16-weight numerics.
    ref_bf16 = generator_reference_bf16(z, params)
    assert jnp.allclose(out, ref_bf16, atol=2e-3, rtol=2e-3), "mismatch vs bf16 reference"

    # Loose check vs. the exact f32 PyTorch-semantics reference (bf16 weight quantization).
    ref_f32 = generator_reference_f32(z, params)
    assert jnp.allclose(out, ref_f32, atol=1e-1, rtol=1e-1), "mismatch vs f32 reference"

    print("KERNEL_OK")
</pallas_src>

<mosaic_0001>
module attributes {stable_mosaic.version = 11 : i64} {
  func.func @generator_kernel(%arg0: i32, %arg1: memref<8x128xbf16, #tpu.memory_space<vmem>>, %arg2: memref<128x256xbf16, #tpu.memory_space<vmem>>, %arg3: memref<4x256x256xbf16, #tpu.memory_space<vmem>>, %arg4: memref<256x896xbf16, #tpu.memory_space<vmem>>, %arg5: memref<5x256xf32, #tpu.memory_space<vmem>>, %arg6: memref<1x896xf32, #tpu.memory_space<vmem>>, %arg7: memref<8x896xf32, #tpu.memory_space<vmem>>) attributes {dimension_semantics = [#tpu.dimension_semantics<parallel>], iteration_bounds = array<i64: 1>, scalar_prefetch = 0 : i64, scratch_operands = 0 : i64, tpu.core_type = #tpu.core_type<tc>, window_params = [{transform_indices = @transform_0, window_bounds = array<i64: 8, 128>}, {pipeline_mode = #tpu.pipeline_mode<synchronous>, transform_indices = @transform_1, window_bounds = array<i64: 128, 256>}, {pipeline_mode = #tpu.pipeline_mode<synchronous>, transform_indices = @transform_2, window_bounds = array<i64: 4, 256, 256>}, {pipeline_mode = #tpu.pipeline_mode<synchronous>, transform_indices = @transform_3, window_bounds = array<i64: 256, 896>}, {pipeline_mode = #tpu.pipeline_mode<synchronous>, transform_indices = @transform_4, window_bounds = array<i64: 5, 256>}, {pipeline_mode = #tpu.pipeline_mode<synchronous>, transform_indices = @transform_5, window_bounds = array<i64: 1, 896>}, {transform_indices = @transform_6, window_bounds = array<i64: 8, 896>}]} {
    %c0 = arith.constant 0 : index
    %c0_0 = arith.constant 0 : index
    %0 = vector.load %arg1[%c0, %c0_0] : memref<8x128xbf16, #tpu.memory_space<vmem>>, vector<8x128xbf16>
    %c0_1 = arith.constant 0 : index
    %c0_2 = arith.constant 0 : index
    %1 = vector.load %arg2[%c0_1, %c0_2] : memref<128x256xbf16, #tpu.memory_space<vmem>>, vector<128x256xbf16>
    %cst = arith.constant dense<0.000000e+00> : vector<8x256xf32>
    %2 = tpu.matmul %0, %1, %cst {dimension_numbers = #tpu.dot_dimension_numbers<[1], [0], [0], [1], [0, 0, 1, 1], [], []>} : vector<8x128xbf16>, vector<128x256xbf16>, vector<8x256xf32> -> vector<8x256xf32>
    %c0_3 = arith.constant 0 : index
    %c0_4 = arith.constant 0 : index
    %3 = vector.load %arg5[%c0_3, %c0_4] : memref<5x256xf32, #tpu.memory_space<vmem>>, vector<1x256xf32>
    %4 = vector.broadcast %3 : vector<1x256xf32> to vector<8x256xf32>
    %5 = arith.addf %2, %4 : vector<8x256xf32>
    %cst_5 = arith.constant 0.000000e+00 : f32
    %6 = vector.broadcast %cst_5 : f32 to vector<8x256xf32>
    %7 = arith.cmpf ogt, %5, %6 : vector<8x256xf32>
    %cst_6 = arith.constant 2.000000e-01 : f32
    %8 = vector.broadcast %cst_6 : f32 to vector<8x256xf32>
    %9 = arith.mulf %8, %5 : vector<8x256xf32>
    %10 = arith.select %7, %5, %9 : vector<8x256xi1>, vector<8x256xf32>
    %11 = arith.truncf %10 : vector<8x256xf32> to vector<8x256xbf16>
    %c0_7 = arith.constant 0 : index
    %c0_8 = arith.constant 0 : index
    %c0_9 = arith.constant 0 : index
    %12 = vector.load %arg3[%c0_7, %c0_8, %c0_9] : memref<4x256x256xbf16, #tpu.memory_space<vmem>>, vector<1x256x256xbf16>
    %13 = vector.shape_cast %12 : vector<1x256x256xbf16> to vector<256x256xbf16>
    %cst_10 = arith.constant dense<0.000000e+00> : vector<8x256xf32>
    %14 = tpu.matmul %11, %13, %cst_10 {dimension_numbers = #tpu.dot_dimension_numbers<[1], [0], [0], [1], [0, 0, 1, 1], [], []>} : vector<8x256xbf16>, vector<256x256xbf16>, vector<8x256xf32> -> vector<8x256xf32>
    %c1 = arith.constant 1 : index
    %c0_11 = arith.constant 0 : index
    %15 = vector.load %arg5[%c1, %c0_11] : memref<5x256xf32, #tpu.memory_space<vmem>>, vector<1x256xf32>
    %16 = vector.broadcast %15 : vector<1x256xf32> to vector<8x256xf32>
    %17 = arith.addf %14, %16 : vector<8x256xf32>
    %cst_12 = arith.constant 0.000000e+00 : f32
    %18 = vector.broadcast %cst_12 : f32 to vector<8x256xf32>
    %19 = arith.cmpf ogt, %17, %18 : vector<8x256xf32>
    %cst_13 = arith.constant 2.000000e-01 : f32
    %20 = vector.broadcast %cst_13 : f32 to vector<8x256xf32>
    %21 = arith.mulf %20, %17 : vector<8x256xf32>
    %22 = arith.select %19, %17, %21 : vector<8x256xi1>, vector<8x256xf32>
    %23 = arith.truncf %22 : vector<8x256xf32> to vector<8x256xbf16>
    %c1_14 = arith.constant 1 : index
    %c0_15 = arith.constant 0 : index
    %c0_16 = arith.constant 0 : index
    %24 = vector.load %arg3[%c1_14, %c0_15, %c0_16] : memref<4x256x256xbf16, #tpu.memory_space<vmem>>, vector<1x256x256xbf16>
    %25 = vector.shape_cast %24 : vector<1x256x256xbf16> to vector<256x256xbf16>
    %cst_17 = arith.constant dense<0.000000e+00> : vector<8x256xf32>
    %26 = tpu.matmul %23, %25, %cst_17 {dimension_numbers = #tpu.dot_dimension_numbers<[1], [0], [0], [1], [0, 0, 1, 1], [], []>} : vector<8x256xbf16>, vector<256x256xbf16>, vector<8x256xf32> -> vector<8x256xf32>
    %c2 = arith.constant 2 : index
    %c0_18 = arith.constant 0 : index
    %27 = vector.load %arg5[%c2, %c0_18] : memref<5x256xf32, #tpu.memory_space<vmem>>, vector<1x256xf32>
    %28 = vector.broadcast %27 : vector<1x256xf32> to vector<8x256xf32>
    %29 = arith.addf %26, %28 : vector<8x256xf32>
    %cst_19 = arith.constant 0.000000e+00 : f32
    %30 = vector.broadcast %cst_19 : f32 to vector<8x256xf32>
    %31 = arith.cmpf ogt, %29, %30 : vector<8x256xf32>
    %cst_20 = arith.constant 2.000000e-01 : f32
    %32 = vector.broadcast %cst_20 : f32 to vector<8x256xf32>
    %33 = arith.mulf %32, %29 : vector<8x256xf32>
    %34 = arith.select %31, %29, %33 : vector<8x256xi1>, vector<8x256xf32>
    %35 = arith.truncf %34 : vector<8x256xf32> to vector<8x256xbf16>
    %c2_21 = arith.constant 2 : index
    %c0_22 = arith.constant 0 : index
    %c0_23 = arith.constant 0 : index
    %36 = vector.load %arg3[%c2_21, %c0_22, %c0_23] : memref<4x256x256xbf16, #tpu.memory_space<vmem>>, vector<1x256x256xbf16>
    %37 = vector.shape_cast %36 : vector<1x256x256xbf16> to vector<256x256xbf16>
    %cst_24 = arith.constant dense<0.000000e+00> : vector<8x256xf32>
    %38 = tpu.matmul %35, %37, %cst_24 {dimension_numbers = #tpu.dot_dimension_numbers<[1], [0], [0], [1], [0, 0, 1, 1], [], []>} : vector<8x256xbf16>, vector<256x256xbf16>, vector<8x256xf32> -> vector<8x256xf32>
    %c3 = arith.constant 3 : index
    %c0_25 = arith.constant 0 : index
    %39 = vector.load %arg5[%c3, %c0_25] : memref<5x256xf32, #tpu.memory_space<vmem>>, vector<1x256xf32>
    %40 = vector.broadcast %39 : vector<1x256xf32> to vector<8x256xf32>
    %41 = arith.addf %38, %40 : vector<8x256xf32>
    %cst_26 = arith.constant 0.000000e+00 : f32
    %42 = vector.broadcast %cst_26 : f32 to vector<8x256xf32>
    %43 = arith.cmpf ogt, %41, %42 : vector<8x256xf32>
    %cst_27 = arith.constant 2.000000e-01 : f32
    %44 = vector.broadcast %cst_27 : f32 to vector<8x256xf32>
    %45 = arith.mulf %44, %41 : vector<8x256xf32>
    %46 = arith.select %43, %41, %45 : vector<8x256xi1>, vector<8x256xf32>
    %47 = arith.truncf %46 : vector<8x256xf32> to vector<8x256xbf16>
    %c3_28 = arith.constant 3 : index
    %c0_29 = arith.constant 0 : index
    %c0_30 = arith.constant 0 : index
    %48 = vector.load %arg3[%c3_28, %c0_29, %c0_30] : memref<4x256x256xbf16, #tpu.memory_space<vmem>>, vector<1x256x256xbf16>
    %49 = vector.shape_cast %48 : vector<1x256x256xbf16> to vector<256x256xbf16>
    %cst_31 = arith.constant dense<0.000000e+00> : vector<8x256xf32>
    %50 = tpu.matmul %47, %49, %cst_31 {dimension_numbers = #tpu.dot_dimension_numbers<[1], [0], [0], [1], [0, 0, 1, 1], [], []>} : vector<8x256xbf16>, vector<256x256xbf16>, vector<8x256xf32> -> vector<8x256xf32>
    %c4 = arith.constant 4 : index
    %c0_32 = arith.constant 0 : index
    %51 = vector.load %arg5[%c4, %c0_32] : memref<5x256xf32, #tpu.memory_space<vmem>>, vector<1x256xf32>
    %52 = vector.broadcast %51 : vector<1x256xf32> to vector<8x256xf32>
    %53 = arith.addf %50, %52 : vector<8x256xf32>
    %cst_33 = arith.constant 0.000000e+00 : f32
    %54 = vector.broadcast %cst_33 : f32 to vector<8x256xf32>
    %55 = arith.cmpf ogt, %53, %54 : vector<8x256xf32>
    %cst_34 = arith.constant 2.000000e-01 : f32
    %56 = vector.broadcast %cst_34 : f32 to vector<8x256xf32>
    %57 = arith.mulf %56, %53 : vector<8x256xf32>
    %58 = arith.select %55, %53, %57 : vector<8x256xi1>, vector<8x256xf32>
    %59 = arith.truncf %58 : vector<8x256xf32> to vector<8x256xbf16>
    %c0_35 = arith.constant 0 : index
    %c0_36 = arith.constant 0 : index
    %60 = vector.load %arg4[%c0_35, %c0_36] : memref<256x896xbf16, #tpu.memory_space<vmem>>, vector<256x896xbf16>
    %cst_37 = arith.constant dense<0.000000e+00> : vector<8x896xf32>
    %61 = tpu.matmul %59, %60, %cst_37 {dimension_numbers = #tpu.dot_dimension_numbers<[1], [0], [0], [1], [0, 0, 1, 1], [], []>} : vector<8x256xbf16>, vector<256x896xbf16>, vector<8x896xf32> -> vector<8x896xf32>
    %c0_38 = arith.constant 0 : index
    %c0_39 = arith.constant 0 : index
    %62 = vector.load %arg6[%c0_38, %c0_39] : memref<1x896xf32, #tpu.memory_space<vmem>>, vector<1x896xf32>
    %63 = vector.broadcast %62 : vector<1x896xf32> to vector<8x896xf32>
    %64 = arith.addf %61, %63 : vector<8x896xf32>
    %65 = math.tanh %64 : vector<8x896xf32>
    %c0_40 = arith.constant 0 : index
    %c0_41 = arith.constant 0 : index
    %66 = vector.load %arg7[%c0_40, %c0_41] : memref<8x896xf32, #tpu.memory_space<vmem>>, vector<8x896xf32>
    tpu.vector_store %arg7[%c0_40, %c0_41], %65 {strides = array<i32>} : memref<8x896xf32, #tpu.memory_space<vmem>>, vector<8x896xf32>,
    return
  }
  func.func @transform_0(%arg0: i32) -> (i32, i32) {
    %c0_i32 = arith.constant 0 : i32
    %c0_i32_0 = arith.constant 0 : i32
    return %arg0, %c0_i32 : i32, i32
  }
  func.func @transform_1(%arg0: i32) -> (i32, i32) {
    %c0_i32 = arith.constant 0 : i32
    %c0_i32_0 = arith.constant 0 : i32
    %c0_i32_1 = arith.constant 0 : i32
    return %c0_i32, %c0_i32_0 : i32, i32
  }
  func.func @transform_2(%arg0: i32) -> (i32, i32, i32) {
    %c0_i32 = arith.constant 0 : i32
    %c0_i32_0 = arith.constant 0 : i32
    %c0_i32_1 = arith.constant 0 : i32
    %c0_i32_2 = arith.constant 0 : i32
    return %c0_i32, %c0_i32_0, %c0_i32_1 : i32, i32, i32
  }
  func.func @transform_3(%arg0: i32) -> (i32, i32) {
    %c0_i32 = arith.constant 0 : i32
    %c0_i32_0 = arith.constant 0 : i32
    %c0_i32_1 = arith.constant 0 : i32
    return %c0_i32, %c0_i32_0 : i32, i32
  }
  func.func @transform_4(%arg0: i32) -> (i32, i32) {
    %c0_i32 = arith.constant 0 : i32
    %c0_i32_0 = arith.constant 0 : i32
    %c0_i32_1 = arith.constant 0 : i32
    return %c0_i32, %c0_i32_0 : i32, i32
  }
  func.func @transform_5(%arg0: i32) -> (i32, i32) {
    %c0_i32 = arith.constant 0 : i32
    %c0_i32_0 = arith.constant 0 : i32
    %c0_i32_1 = arith.constant 0 : i32
    return %c0_i32, %c0_i32_0 : i32, i32
  }
  func.func @transform_6(%arg0: i32) -> (i32, i32) {
    %c0_i32 = arith.constant 0 : i32
    %c0_i32_0 = arith.constant 0 : i32
    return %arg0, %c0_i32 : i32, i32
  }
}

</mosaic_0001>

<llo_original>
// kernel: _generator_forward_impl.1
$region0: #{_generator_forward_impl.1}
  #allocation0 [shape = 'u32[]', space=smem, size = 0x4, offset = 0x4, fixed_abs, tag = 'smem constant byte address 0x4 - core index']
  #allocation1 [shape = 'u32[144,128]{1,0:T(1,128)}', space=vmem, size = 0x12000, scoped, tag = 'internal scratch']
  %s0 = inlined_call_operand.vmem [shape: bf16[8,128], index: 0, kind: input, shape index: {}]
  %s1 = inlined_call_operand.hbm [shape: bf16[128,256], index: 1, kind: input, shape index: {}]
  %s2 = inlined_call_operand.hbm [shape: bf16[4,256,256], index: 2, kind: input, shape index: {}]
  %s3 = inlined_call_operand.hbm [shape: bf16[256,896], index: 3, kind: input, shape index: {}]
  %s4 = inlined_call_operand.vmem [shape: f32[5,256], index: 4, kind: input, shape index: {}]
  %s5 = inlined_call_operand.vmem [shape: f32[1,896], index: 5, kind: input, shape index: {}]
  %s6 = inlined_call_operand.hbm [shape: f32[8,896], index: 6, kind: output, shape index: {}]
  %s7 = sld [smem:[#allocation0]]
  $region46: #{_generator_forward_impl.1} parent=0
    _
  %s9 = ssub.s32 1, %s7
  %s10 = scalar_select 0, %s9, %s7
  $region1: #{_generator_forward_impl.1} parent=0
    #allocation2 [shape = 'u8[65536]{0}', space=vmem, size = 0x10000, scoped, tag = 'input window, operand 1, single buffered']
    #allocation3 [shape = 's32[1]{0}', space=sflag, size = 0x4, scoped, tag = 'scoped memory for _generator_forward_impl.1']
    #allocation4 [shape = 's32[1]{0}', space=sflag, size = 0x4, scoped, tag = 'scoped memory for _generator_forward_impl.1']
    #allocation5 [shape = 'u8[524288]{0}', space=vmem, size = 0x80000, scoped, tag = 'input window, operand 2, single buffered']
    #allocation6 [shape = 's32[1]{0}', space=sflag, size = 0x4, scoped, tag = 'scoped memory for _generator_forward_impl.1']
    #allocation7 [shape = 'u8[458752]{0}', space=vmem, size = 0x70000, scoped, tag = 'input window, operand 3, single buffered']
    #allocation8 [shape = 'u8[28672]{0}', space=vmem, size = 0x7000, scoped, tag = 'output window, operand 0, single buffered']
    %11 = vsyncpa [#allocation3], 0
    %12 = vsyncpa [#allocation6], 0
    %13 = vsyncpa [#allocation4], 0
    // Predicated region
    $region2: #{_generator_forward_impl.1} parent=1 // pred_check
      _
    $region3: #{_generator_forward_impl.1} parent=1 // pred_check_branch
      %15 = sbr.rel (0) target = $region5
    $region4: #{_generator_forward_impl.1} parent=1 // pred_region
      _
    $region5: #{_generator_forward_impl.1} parent=1 // pred_fallthru
      _
    // Predicated region
    $region6: #{_generator_forward_impl.1} parent=1 // pred_check
      _
    $region7: #{_generator_forward_impl.1} parent=1 // pred_check_branch
      %17 = sbr.rel (0) target = $region9
    $region8: #{_generator_forward_impl.1} parent=1 // pred_region
      %s19 = ssub.s32 2048, 2048
      %20 = vsyncadd [#allocation3], %s19
      %s21 = sshll.u32 [#allocation2], 4
      %s22 = int_to_ptr.vmem [resolvable:$true] %s21
      %27 = dma.hbm_to_vmem [thread:$0]  %s1, 2048, %s22, [#allocation3], 128, 128, 8
    $region9: #{_generator_forward_impl.1} parent=1 // pred_fallthru
      _
    // Predicated region
    $region10: #{_generator_forward_impl.1} parent=1 // pred_check
      _
    $region11: #{_generator_forward_impl.1} parent=1 // pred_check_branch
      %29 = sbr.rel (0) target = $region13
    $region12: #{_generator_forward_impl.1} parent=1 // pred_region
      %s31 = ssub.s32 16384, 16384
      %32 = vsyncadd [#allocation6], %s31
      %s33 = sshll.u32 [#allocation5], 4
      %s34 = int_to_ptr.vmem [resolvable:$true] %s33
      %39 = dma.hbm_to_vmem [thread:$0]  %s2, 16384, %s34, [#allocation6], 128, 128, 8
    $region13: #{_generator_forward_impl.1} parent=1 // pred_fallthru
      _
    // Predicated region
    $region14: #{_generator_forward_impl.1} parent=1 // pred_check
      _
    $region15: #{_generator_forward_impl.1} parent=1 // pred_check_branch
      %41 = sbr.rel (0) target = $region17
    $region16: #{_generator_forward_impl.1} parent=1 // pred_region
      %s43 = ssub.s32 14336, 14336
      %44 = vsyncadd [#allocation6], %s43
      %s45 = sshll.u32 [#allocation7], 4
      %s46 = int_to_ptr.vmem [resolvable:$true] %s45
      %51 = dma.hbm_to_vmem [thread:$0]  %s3, 14336, %s46, [#allocation6], 448, 448, 28
    $region17: #{_generator_forward_impl.1} parent=1 // pred_fallthru
      _
    // Predicated region
    $region18: #{_generator_forward_impl.1} parent=1 // pred_check
      _
    $region19: #{_generator_forward_impl.1} parent=1 // pred_check_branch
      %53 = sbr.rel (0) target = $region21
    $region20: #{_generator_forward_impl.1} parent=1 // pred_region
      _
    $region21: #{_generator_forward_impl.1} parent=1 // pred_fallthru
      _
    // Predicated region
    $region22: #{_generator_forward_impl.1} parent=1 // pred_check
      _
    $region23: #{_generator_forward_impl.1} parent=1 // pred_check_branch
      %55 = sbr.rel (0) target = $region25
    $region24: #{_generator_forward_impl.1} parent=1 // pred_region
      _
    $region25: #{_generator_forward_impl.1} parent=1 // pred_fallthru
      _
    // Predicated region
    $region26: #{_generator_forward_impl.1} parent=1 // pred_check
      _
    $region27: #{_generator_forward_impl.1} parent=1 // pred_check_branch
      %57 = sbr.rel (0) target = $region29
    $region28: #{_generator_forward_impl.1} parent=1 // pred_region
      %58 = dma.done [#allocation3], 2048
    $region29: #{_generator_forward_impl.1} parent=1 // pred_fallthru
      _
    // Predicated region
    $region30: #{_generator_forward_impl.1} parent=1 // pred_check
      _
    $region31: #{_generator_forward_impl.1} parent=1 // pred_check_branch
      %60 = sbr.rel (0) target = $region33
    $region32: #{_generator_forward_impl.1} parent=1 // pred_region
      %61 = dma.done [#allocation6], 16384
    $region33: #{_generator_forward_impl.1} parent=1 // pred_fallthru
      _
    // Predicated region
    $region34: #{_generator_forward_impl.1} parent=1 // pred_check
      _
    $region35: #{_generator_forward_impl.1} parent=1 // pred_check_branch
      %63 = sbr.rel (0) target = $region37
    $region36: #{_generator_forward_impl.1} parent=1 // pred_region
      %64 = dma.done [#allocation6], 14336
    $region37: #{_generator_forward_impl.1} parent=1 // pred_fallthru
      _
    %v66 = vld [vmem:[%s0] sm:$0xf]
    %v67 = vld [vmem:[#allocation2] sm:$0xff]
    %v68 = vld [vmem:[#allocation2 + $0x8] sm:$0xff]
    %v69 = vld [vmem:[#allocation2 + $0x10] sm:$0xff]
    %v70 = vld [vmem:[#allocation2 + $0x18] sm:$0xff]
    %v71 = vld [vmem:[#allocation2 + $0x20] sm:$0xff]
    %v72 = vld [vmem:[#allocation2 + $0x28] sm:$0xff]
    %v73 = vld [vmem:[#allocation2 + $0x30] sm:$0xff]
    %v74 = vld [vmem:[#allocation2 + $0x38] sm:$0xff]
    %v75 = vld [vmem:[#allocation2 + $0x40] sm:$0xff]
    %v76 = vld [vmem:[#allocation2 + $0x48] sm:$0xff]
    %v77 = vld [vmem:[#allocation2 + $0x50] sm:$0xff]
    %v78 = vld [vmem:[#allocation2 + $0x58] sm:$0xff]
    %v79 = vld [vmem:[#allocation2 + $0x60] sm:$0xff]
    %v80 = vld [vmem:[#allocation2 + $0x68] sm:$0xff]
    %v81 = vld [vmem:[#allocation2 + $0x70] sm:$0xff]
    %v82 = vld [vmem:[#allocation2 + $0x78] sm:$0xff]
    %v83 = vld [vmem:[%s4] ss:$8 sm:$0x3]
    %v85 = vlaneseq
    %v86 = vshrl.u32 %v85, 7
    %v87 = vsub.s32 0, %v86
    %v88 = vrot.slane %v83, %v87
    %v89 = vlaneseq
    %v90 = vshrl.u32 %v89, 7
    %v91 = vsub.s32 1, %v90
    %v92 = vrot.slane %v83, %v91
    %v111 = vunpack.c.l.b16 %v67
    %v112 = vunpack.c.h.b16 %v67
    %v113 = vunpack.c.l.b16 %v68
    %v114 = vunpack.c.h.b16 %v68
    %v115 = vunpack.c.l.b16 %v69
    %v116 = vunpack.c.h.b16 %v69
    %v117 = vunpack.c.l.b16 %v70
    %v118 = vunpack.c.h.b16 %v70
    %v119 = vunpack.c.l.b16 %v71
    %v120 = vunpack.c.h.b16 %v71
    %v121 = vunpack.c.l.b16 %v72
    %v122 = vunpack.c.h.b16 %v72
    %v123 = vunpack.c.l.b16 %v73
    %v124 = vunpack.c.h.b16 %v73
    %v125 = vunpack.c.l.b16 %v74
    %v126 = vunpack.c.h.b16 %v74
    %v127 = vunpack.c.l.b16 %v75
    %v128 = vunpack.c.h.b16 %v75
    %v129 = vunpack.c.l.b16 %v76
    %v130 = vunpack.c.h.b16 %v76
    %v131 = vunpack.c.l.b16 %v77
    %v132 = vunpack.c.h.b16 %v77
    %v133 = vunpack.c.l.b16 %v78
    %v134 = vunpack.c.h.b16 %v78
    %v135 = vunpack.c.l.b16 %v79
    %v136 = vunpack.c.h.b16 %v79
    %v137 = vunpack.c.l.b16 %v80
    %v138 = vunpack.c.h.b16 %v80
    %v139 = vunpack.c.l.b16 %v81
    %v140 = vunpack.c.h.b16 %v81
    %v141 = vunpack.c.l.b16 %v82
    %v142 = vunpack.c.h.b16 %v82
    %v143 = vpack.c.b16 %v113, %v111
    %v144 = vpack.c.b16 %v114, %v112
    %v145 = vpack.c.b16 %v117, %v115
    %v146 = vpack.c.b16 %v118, %v116
    %v147 = vpack.c.b16 %v121, %v119
    %v148 = vpack.c.b16 %v122, %v120
    %v149 = vpack.c.b16 %v125, %v123
    %v150 = vpack.c.b16 %v126, %v124
    %v151 = vpack.c.b16 %v129, %v127
    %v152 = vpack.c.b16 %v130, %v128
    %v153 = vpack.c.b16 %v133, %v131
    %v154 = vpack.c.b16 %v134, %v132
    %v155 = vpack.c.b16 %v137, %v135
    %v156 = vpack.c.b16 %v138, %v136
    %v157 = vpack.c.b16 %v141, %v139
    %v158 = vpack.c.b16 %v142, %v140
    %175 = vmatprep.subr.bf16.mxu0 %v144
    %176 = vmatpush1.bf16.msra.mxu0 %v143
    %177 = vmatprep.subr.bf16.mxu0 %v146
    %178 = vmatpush1.bf16.msra.mxu0 %v145
    %179 = vmatprep.subr.bf16.mxu0 %v148
    %180 = vmatpush1.bf16.msra.mxu0 %v147
    %181 = vmatprep.subr.bf16.mxu0 %v150
    %182 = vmatpush1.bf16.msra.mxu0 %v149
    %183 = vmatprep.subr.bf16.mxu0 %v152
    %184 = vmatpush1.bf16.msra.mxu0 %v151
    %185 = vmatprep.subr.bf16.mxu0 %v154
    %186 = vmatpush1.bf16.msra.mxu0 %v153
    %187 = vmatprep.subr.bf16.mxu0 %v156
    %188 = vmatpush1.bf16.msra.mxu0 %v155
    %189 = vmatprep.subr.bf16.mxu0 %v158
    %190 = vmatpush1.bf16.msra.mxu0 %v157
    %191 = vmatprep.subr.bf16.mxu0 0
    %192 = vmatpush1.bf16.msra.mxu0 0
    %193 = vmatprep.subr.bf16.mxu0 0
    %194 = vmatpush1.bf16.msra.mxu0 0
    %195 = vmatprep.subr.bf16.mxu0 0
    %196 = vmatpush1.bf16.msra.mxu0 0
    %197 = vmatprep.subr.bf16.mxu0 0
    %198 = vmatpush1.bf16.msra.mxu0 0
    %199 = vmatprep.subr.bf16.mxu0 0
    %200 = vmatpush1.bf16.msra.mxu0 0
    %201 = vmatprep.subr.bf16.mxu0 0
    %202 = vmatpush1.bf16.msra.mxu0 0
    %203 = vmatprep.subr.bf16.mxu0 0
    %204 = vmatpush1.bf16.msra.mxu0 0
    %205 = vmatprep.subr.bf16.mxu0 0
    %206 = vmatpush1.bf16.msra.mxu0 0
    %207 = vmatprep.mubr.bf16.mxu0 0
    %208 = vmatmul.mubr.bf16.gmra.mrb[0].mxu0 %v66
    %v209 = vpop.f32.mrb[0].mxu0
    %v210 = vadd.f32 %v88, %v209
    %v211 = vpop.f32.mrb[0].mxu0
    %v212 = vadd.f32 %v92, %v211
    %v213 = vpop.f32.mrb[0].mxu0
    %v214 = vpop.f32.mrb[0].mxu0
    %215 = vdwg.mxu0
    %vm216 = vcmp.gt.f32.partialorder %v210, 0.0
    %vm217 = vcmp.gt.f32.partialorder %v212, 0.0
    %v218 = vmul.f32 %v210, 0.2
    %v219 = vmul.f32 %v212, 0.2
    %v220 = vsel %vm216, %v210, %v218
    %v221 = vsel %vm217, %v212, %v219
    %v222 = vpack.c.bf16 %v220, %v220
    %v223 = vpack.c.bf16 %v221, %v221
    %v224 = vld [vmem:[#allocation5] sm:$0xff]
    %v225 = vld [vmem:[#allocation5 + $0x8] sm:$0xff]
    %v226 = vld [vmem:[#allocation5 + $0x10] sm:$0xff]
    %v227 = vld [vmem:[#allocation5 + $0x18] sm:$0xff]
    %v228 = vld [vmem:[#allocation5 + $0x20] sm:$0xff]
    %v229 = vld [vmem:[#allocation5 + $0x28] sm:$0xff]
    %v230 = vld [vmem:[#allocation5 + $0x30] sm:$0xff]
    %v231 = vld [vmem:[#allocation5 + $0x38] sm:$0xff]
    %v232 = vld [vmem:[#allocation5 + $0x40] sm:$0xff]
    %v233 = vld [vmem:[#allocation5 + $0x48] sm:$0xff]
    %v234 = vld [vmem:[#allocation5 + $0x50] sm:$0xff]
    %v235 = vld [vmem:[#allocation5 + $0x58] sm:$0xff]
    %v236 = vld [vmem:[#allocation5 + $0x60] sm:$0xff]
    %v237 = vld [vmem:[#allocation5 + $0x68] sm:$0xff]
    %v238 = vld [vmem:[#allocation5 + $0x70] sm:$0xff]
    %v239 = vld [vmem:[#allocation5 + $0x78] sm:$0xff]
    %v240 = vld [vmem:[#allocation5 + $0x80] sm:$0xff]
    %v241 = vld [vmem:[#allocation5 + $0x88] sm:$0xff]
    %v242 = vld [vmem:[#allocation5 + $0x90] sm:$0xff]
    %v243 = vld [vmem:[#allocation5 + $0x98] sm:$0xff]
    %v244 = vld [vmem:[#allocation5 + $0xa0] sm:$0xff]
    %v245 = vld [vmem:[#allocation5 + $0xa8] sm:$0xff]
    %v246 = vld [vmem:[#allocation5 + $0xb0] sm:$0xff]
    %v247 = vld [vmem:[#allocation5 + $0xb8] sm:$0xff]
    %v248 = vld [vmem:[#allocation5 + $0xc0] sm:$0xff]
    %v249 = vld [vmem:[#allocation5 + $0xc8] sm:$0xff]
    %v250 = vld [vmem:[#allocation5 + $0xd0] sm:$0xff]
    %v251 = vld [vmem:[#allocation5 + $0xd8] sm:$0xff]
    %v252 = vld [vmem:[#allocation5 + $0xe0] sm:$0xff]
    %v253 = vld [vmem:[#allocation5 + $0xe8] sm:$0xff]
    %v254 = vld [vmem:[#allocation5 + $0xf0] sm:$0xff]
    %v255 = vld [vmem:[#allocation5 + $0xf8] sm:$0xff]
    %s256 = scalar_lea.vmem %s4, 1
    %v257 = vld [vmem:[%s256] ss:$8 sm:$0x3]
    %v259 = vlaneseq
    %v260 = vshrl.u32 %v259, 7
    %v261 = vsub.s32 0, %v260
    %v262 = vrot.slane %v257, %v261
    %v263 = vlaneseq
    %v264 = vshrl.u32 %v263, 7
    %v265 = vsub.s32 1, %v264
    %v266 = vrot.slane %v257, %v265
    %v301 = vunpack.c.l.b16 %v224
    %v302 = vunpack.c.h.b16 %v224
    %v303 = vunpack.c.l.b16 %v225
    %v304 = vunpack.c.h.b16 %v225
    %v305 = vunpack.c.l.b16 %v226
    %v306 = vunpack.c.h.b16 %v226
    %v307 = vunpack.c.l.b16 %v227
    %v308 = vunpack.c.h.b16 %v227
    %v309 = vunpack.c.l.b16 %v228
    %v310 = vunpack.c.h.b16 %v228
    %v311 = vunpack.c.l.b16 %v229
    %v312 = vunpack.c.h.b16 %v229
    %v313 = vunpack.c.l.b16 %v230
    %v314 = vunpack.c.h.b16 %v230
    %v315 = vunpack.c.l.b16 %v231
    %v316 = vunpack.c.h.b16 %v231
    %v317 = vunpack.c.l.b16 %v232
    %v318 = vunpack.c.h.b16 %v232
    %v319 = vunpack.c.l.b16 %v233
    %v320 = vunpack.c.h.b16 %v233
    %v321 = vunpack.c.l.b16 %v234
    %v322 = vunpack.c.h.b16 %v234
    %v323 = vunpack.c.l.b16 %v235
    %v324 = vunpack.c.h.b16 %v235
    %v325 = vunpack.c.l.b16 %v236
    %v326 = vunpack.c.h.b16 %v236
    %v327 = vunpack.c.l.b16 %v237
    %v328 = vunpack.c.h.b16 %v237
    %v329 = vunpack.c.l.b16 %v238
    %v330 = vunpack.c.h.b16 %v238
    %v331 = vunpack.c.l.b16 %v239
    %v332 = vunpack.c.h.b16 %v239
    %v333 = vunpack.c.l.b16 %v240
    %v334 = vunpack.c.h.b16 %v240
    %v335 = vunpack.c.l.b16 %v241
    %v336 = vunpack.c.h.b16 %v241
    %v337 = vunpack.c.l.b16 %v242
    %v338 = vunpack.c.h.b16 %v242
    %v339 = vunpack.c.l.b16 %v243
    %v340 = vunpack.c.h.b16 %v243
    %v341 = vunpack.c.l.b16 %v244
    %v342 = vunpack.c.h.b16 %v244
    %v343 = vunpack.c.l.b16 %v245
    %v344 = vunpack.c.h.b16 %v245
    %v345 = vunpack.c.l.b16 %v246
    %v346 = vunpack.c.h.b16 %v246
    %v347 = vunpack.c.l.b16 %v247
    %v348 = vunpack.c.h.b16 %v247
    %v349 = vunpack.c.l.b16 %v248
    %v350 = vunpack.c.h.b16 %v248
    %v351 = vunpack.c.l.b16 %v249
    %v352 = vunpack.c.h.b16 %v249
    %v353 = vunpack.c.l.b16 %v250
    %v354 = vunpack.c.h.b16 %v250
    %v355 = vunpack.c.l.b16 %v251
    %v356 = vunpack.c.h.b16 %v251
    %v357 = vunpack.c.l.b16 %v252
    %v358 = vunpack.c.h.b16 %v252
    %v359 = vunpack.c.l.b16 %v253
    %v360 = vunpack.c.h.b16 %v253
    %v361 = vunpack.c.l.b16 %v254
    %v362 = vunpack.c.h.b16 %v254
    %v363 = vunpack.c.l.b16 %v255
    %v364 = vunpack.c.h.b16 %v255
    %v365 = vpack.c.b16 %v303, %v301
    %v366 = vpack.c.b16 %v304, %v302
    %v367 = vpack.c.b16 %v307, %v305
    %v368 = vpack.c.b16 %v308, %v306
    %v369 = vpack.c.b16 %v311, %v309
    %v370 = vpack.c.b16 %v312, %v310
    %v371 = vpack.c.b16 %v315, %v313
    %v372 = vpack.c.b16 %v316, %v314
    %v373 = vpack.c.b16 %v319, %v317
    %v374 = vpack.c.b16 %v320, %v318
    %v375 = vpack.c.b16 %v323, %v321
    %v376 = vpack.c.b16 %v324, %v322
    %v377 = vpack.c.b16 %v327, %v325
    %v378 = vpack.c.b16 %v328, %v326
    %v379 = vpack.c.b16 %v331, %v329
    %v380 = vpack.c.b16 %v332, %v330
    %v381 = vpack.c.b16 %v335, %v333
    %v382 = vpack.c.b16 %v336, %v334
    %v383 = vpack.c.b16 %v339, %v337
    %v384 = vpack.c.b16 %v340, %v338
    %v385 = vpack.c.b16 %v343, %v341
    %v386 = vpack.c.b16 %v344, %v342
    %v387 = vpack.c.b16 %v347, %v345
    %v388 = vpack.c.b16 %v348, %v346
    %v389 = vpack.c.b16 %v351, %v349
    %v390 = vpack.c.b16 %v352, %v350
    %v391 = vpack.c.b16 %v355, %v353
    %v392 = vpack.c.b16 %v356, %v354
    %v393 = vpack.c.b16 %v359, %v357
    %v394 = vpack.c.b16 %v360, %v358
    %v395 = vpack.c.b16 %v363, %v361
    %v396 = vpack.c.b16 %v364, %v362
    %429 = vmatprep.subr.bf16.mxu0 %v366
    %430 = vmatpush1.bf16.msra.mxu0 %v365
    %431 = vmatprep.subr.bf16.mxu0 %v368
    %432 = vmatpush1.bf16.msra.mxu0 %v367
    %433 = vmatprep.subr.bf16.mxu0 %v370
    %434 = vmatpush1.bf16.msra.mxu0 %v369
    %435 = vmatprep.subr.bf16.mxu0 %v372
    %436 = vmatpush1.bf16.msra.mxu0 %v371
    %437 = vmatprep.subr.bf16.mxu0 %v374
    %438 = vmatpush1.bf16.msra.mxu0 %v373
    %439 = vmatprep.subr.bf16.mxu0 %v376
    %440 = vmatpush1.bf16.msra.mxu0 %v375
    %441 = vmatprep.subr.bf16.mxu0 %v378
    %442 = vmatpush1.bf16.msra.mxu0 %v377
    %443 = vmatprep.subr.bf16.mxu0 %v380
    %444 = vmatpush1.bf16.msra.mxu0 %v379
    %445 = vmatprep.subr.bf16.mxu0 %v382
    %446 = vmatpush1.bf16.msra.mxu0 %v381
    %447 = vmatprep.subr.bf16.mxu0 %v384
    %448 = vmatpush1.bf16.msra.mxu0 %v383
    %449 = vmatprep.subr.bf16.mxu0 %v386
    %450 = vmatpush1.bf16.msra.mxu0 %v385
    %451 = vmatprep.subr.bf16.mxu0 %v388
    %452 = vmatpush1.bf16.msra.mxu0 %v387
    %453 = vmatprep.subr.bf16.mxu0 %v390
    %454 = vmatpush1.bf16.msra.mxu0 %v389
    %455 = vmatprep.subr.bf16.mxu0 %v392
    %456 = vmatpush1.bf16.msra.mxu0 %v391
    %457 = vmatprep.subr.bf16.mxu0 %v394
    %458 = vmatpush1.bf16.msra.mxu0 %v393
    %459 = vmatprep.subr.bf16.mxu0 %v396
    %460 = vmatpush1.bf16.msra.mxu0 %v395
    %461 = vmatprep.mubr.bf16.mxu0 %v223
    %462 = vmatmul.mubr.bf16.gmra.mrb[0].mxu0 %v222
    %v463 = vpop.f32.mrb[0].mxu0
    %v464 = vadd.f32 %v262, %v463
    %v465 = vpop.f32.mrb[0].mxu0
    %v466 = vadd.f32 %v266, %v465
    %v467 = vpop.f32.mrb[0].mxu0
    %v468 = vpop.f32.mrb[0].mxu0
    %469 = vdwg.mxu0
    %vm470 = vcmp.gt.f32.partialorder %v464, 0.0
    %vm471 = vcmp.gt.f32.partialorder %v466, 0.0
    %v472 = vmul.f32 %v464, 0.2
    %v473 = vmul.f32 %v466, 0.2
    %v474 = vsel %vm470, %v464, %v472
    %v475 = vsel %vm471, %v466, %v473
    %v476 = vpack.c.bf16 %v474, %v474
    %v477 = vpack.c.bf16 %v475, %v475
    %s478 = scalar_lea.vmem [#allocation5], 256
    %v479 = vld [vmem:[%s478] sm:$0xff]
    %v480 = vld [vmem:[%s478 + $0x8] sm:$0xff]
    %v481 = vld [vmem:[%s478 + $0x10] sm:$0xff]
    %v482 = vld [vmem:[%s478 + $0x18] sm:$0xff]
    %v483 = vld [vmem:[%s478 + $0x20] sm:$0xff]
    %v484 = vld [vmem:[%s478 + $0x28] sm:$0xff]
    %v485 = vld [vmem:[%s478 + $0x30] sm:$0xff]
    %v486 = vld [vmem:[%s478 + $0x38] sm:$0xff]
    %v487 = vld [vmem:[%s478 + $0x40] sm:$0xff]
    %v488 = vld [vmem:[%s478 + $0x48] sm:$0xff]
    %v489 = vld [vmem:[%s478 + $0x50] sm:$0xff]
    %v490 = vld [vmem:[%s478 + $0x58] sm:$0xff]
    %v491 = vld [vmem:[%s478 + $0x60] sm:$0xff]
    %v492 = vld [vmem:[%s478 + $0x68] sm:$0xff]
    %v493 = vld [vmem:[%s478 + $0x70] sm:$0xff]
    %v494 = vld [vmem:[%s478 + $0x78] sm:$0xff]
    %v495 = vld [vmem:[%s478 + $0x80] sm:$0xff]
    %v496 = vld [vmem:[%s478 + $0x88] sm:$0xff]
    %v497 = vld [vmem:[%s478 + $0x90] sm:$0xff]
    %v498 = vld [vmem:[%s478 + $0x98] sm:$0xff]
    %v499 = vld [vmem:[%s478 + $0xa0] sm:$0xff]
    %v500 = vld [vmem:[%s478 + $0xa8] sm:$0xff]
    %v501 = vld [vmem:[%s478 + $0xb0] sm:$0xff]
    %v502 = vld [vmem:[%s478 + $0xb8] sm:$0xff]
    %v503 = vld [vmem:[%s478 + $0xc0] sm:$0xff]
    %v504 = vld [vmem:[%s478 + $0xc8] sm:$0xff]
    %v505 = vld [vmem:[%s478 + $0xd0] sm:$0xff]
    %v506 = vld [vmem:[%s478 + $0xd8] sm:$0xff]
    %v507 = vld [vmem:[%s478 + $0xe0] sm:$0xff]
    %v508 = vld [vmem:[%s478 + $0xe8] sm:$0xff]
    %v509 = vld [vmem:[%s478 + $0xf0] sm:$0xff]
    %v510 = vld [vmem:[%s478 + $0xf8] sm:$0xff]
    %s511 = scalar_lea.vmem %s4, 2
    %v512 = vld [vmem:[%s511] ss:$8 sm:$0x3]
    %v514 = vlaneseq
    %v515 = vshrl.u32 %v514, 7
    %v516 = vsub.s32 0, %v515
    %v517 = vrot.slane %v512, %v516
    %v518 = vlaneseq
    %v519 = vshrl.u32 %v518, 7
    %v520 = vsub.s32 1, %v519
    %v521 = vrot.slane %v512, %v520
    %v556 = vunpack.c.l.b16 %v479
    %v557 = vunpack.c.h.b16 %v479
    %v558 = vunpack.c.l.b16 %v480
    %v559 = vunpack.c.h.b16 %v480
    %v560 = vunpack.c.l.b16 %v481
    %v561 = vunpack.c.h.b16 %v481
    %v562 = vunpack.c.l.b16 %v482
    %v563 = vunpack.c.h.b16 %v482
    %v564 = vunpack.c.l.b16 %v483
    %v565 = vunpack.c.h.b16 %v483
    %v566 = vunpack.c.l.b16 %v484
    %v567 = vunpack.c.h.b16 %v484
    %v568 = vunpack.c.l.b16 %v485
    %v569 = vunpack.c.h.b16 %v485
    %v570 = vunpack.c.l.b16 %v486
    %v571 = vunpack.c.h.b16 %v486
    %v572 = vunpack.c.l.b16 %v487
    %v573 = vunpack.c.h.b16 %v487
    %v574 = vunpack.c.l.b16 %v488
    %v575 = vunpack.c.h.b16 %v488
    %v576 = vunpack.c.l.b16 %v489
    %v577 = vunpack.c.h.b16 %v489
    %v578 = vunpack.c.l.b16 %v490
    %v579 = vunpack.c.h.b16 %v490
    %v580 = vunpack.c.l.b16 %v491
    %v581 = vunpack.c.h.b16 %v491
    %v582 = vunpack.c.l.b16 %v492
    %v583 = vunpack.c.h.b16 %v492
    %v584 = vunpack.c.l.b16 %v493
    %v585 = vunpack.c.h.b16 %v493
    %v586 = vunpack.c.l.b16 %v494
    %v587 = vunpack.c.h.b16 %v494
    %v588 = vunpack.c.l.b16 %v495
    %v589 = vunpack.c.h.b16 %v495
    %v590 = vunpack.c.l.b16 %v496
    %v591 = vunpack.c.h.b16 %v496
    %v592 = vunpack.c.l.b16 %v497
    %v593 = vunpack.c.h.b16 %v497
    %v594 = vunpack.c.l.b16 %v498
    %v595 = vunpack.c.h.b16 %v498
    %v596 = vunpack.c.l.b16 %v499
    %v597 = vunpack.c.h.b16 %v499
    %v598 = vunpack.c.l.b16 %v500
    %v599 = vunpack.c.h.b16 %v500
    %v600 = vunpack.c.l.b16 %v501
    %v601 = vunpack.c.h.b16 %v501
    %v602 = vunpack.c.l.b16 %v502
    %v603 = vunpack.c.h.b16 %v502
    %v604 = vunpack.c.l.b16 %v503
    %v605 = vunpack.c.h.b16 %v503
    %v606 = vunpack.c.l.b16 %v504
    %v607 = vunpack.c.h.b16 %v504
    %v608 = vunpack.c.l.b16 %v505
    %v609 = vunpack.c.h.b16 %v505
    %v610 = vunpack.c.l.b16 %v506
    %v611 = vunpack.c.h.b16 %v506
    %v612 = vunpack.c.l.b16 %v507
    %v613 = vunpack.c.h.b16 %v507
    %v614 = vunpack.c.l.b16 %v508
    %v615 = vunpack.c.h.b16 %v508
    %v616 = vunpack.c.l.b16 %v509
    %v617 = vunpack.c.h.b16 %v509
    %v618 = vunpack.c.l.b16 %v510
    %v619 = vunpack.c.h.b16 %v510
    %v620 = vpack.c.b16 %v558, %v556
    %v621 = vpack.c.b16 %v559, %v557
    %v622 = vpack.c.b16 %v562, %v560
    %v623 = vpack.c.b16 %v563, %v561
    %v624 = vpack.c.b16 %v566, %v564
    %v625 = vpack.c.b16 %v567, %v565
    %v626 = vpack.c.b16 %v570, %v568
    %v627 = vpack.c.b16 %v571, %v569
    %v628 = vpack.c.b16 %v574, %v572
    %v629 = vpack.c.b16 %v575, %v573
    %v630 = vpack.c.b16 %v578, %v576
    %v631 = vpack.c.b16 %v579, %v577
    %v632 = vpack.c.b16 %v582, %v580
    %v633 = vpack.c.b16 %v583, %v581
    %v634 = vpack.c.b16 %v586, %v584
    %v635 = vpack.c.b16 %v587, %v585
    %v636 = vpack.c.b16 %v590, %v588
    %v637 = vpack.c.b16 %v591, %v589
    %v638 = vpack.c.b16 %v594, %v592
    %v639 = vpack.c.b16 %v595, %v593
    %v640 = vpack.c.b16 %v598, %v596
    %v641 = vpack.c.b16 %v599, %v597
    %v642 = vpack.c.b16 %v602, %v600
    %v643 = vpack.c.b16 %v603, %v601
    %v644 = vpack.c.b16 %v606, %v604
    %v645 = vpack.c.b16 %v607, %v605
    %v646 = vpack.c.b16 %v610, %v608
    %v647 = vpack.c.b16 %v611, %v609
    %v648 = vpack.c.b16 %v614, %v612
    %v649 = vpack.c.b16 %v615, %v613
    %v650 = vpack.c.b16 %v618, %v616
    %v651 = vpack.c.b16 %v619, %v617
    %684 = vmatprep.subr.bf16.mxu0 %v621
    %685 = vmatpush1.bf16.msra.mxu0 %v620
    %686 = vmatprep.subr.bf16.mxu0 %v623
    %687 = vmatpush1.bf16.msra.mxu0 %v622
    %688 = vmatprep.subr.bf16.mxu0 %v625
    %689 = vmatpush1.bf16.msra.mxu0 %v624
    %690 = vmatprep.subr.bf16.mxu0 %v627
    %691 = vmatpush1.bf16.msra.mxu0 %v626
    %692 = vmatprep.subr.bf16.mxu0 %v629
    %693 = vmatpush1.bf16.msra.mxu0 %v628
    %694 = vmatprep.subr.bf16.mxu0 %v631
    %695 = vmatpush1.bf16.msra.mxu0 %v630
    %696 = vmatprep.subr.bf16.mxu0 %v633
    %697 = vmatpush1.bf16.msra.mxu0 %v632
    %698 = vmatprep.subr.bf16.mxu0 %v635
    %699 = vmatpush1.bf16.msra.mxu0 %v634
    %700 = vmatprep.subr.bf16.mxu0 %v637
    %701 = vmatpush1.bf16.msra.mxu0 %v636
    %702 = vmatprep.subr.bf16.mxu0 %v639
    %703 = vmatpush1.bf16.msra.mxu0 %v638
    %704 = vmatprep.subr.bf16.mxu0 %v641
    %705 = vmatpush1.bf16.msra.mxu0 %v640
    %706 = vmatprep.subr.bf16.mxu0 %v643
    %707 = vmatpush1.bf16.msra.mxu0 %v642
    %708 = vmatprep.subr.bf16.mxu0 %v645
    %709 = vmatpush1.bf16.msra.mxu0 %v644
    %710 = vmatprep.subr.bf16.mxu0 %v647
    %711 = vmatpush1.bf16.msra.mxu0 %v646
    %712 = vmatprep.subr.bf16.mxu0 %v649
    %713 = vmatpush1.bf16.msra.mxu0 %v648
    %714 = vmatprep.subr.bf16.mxu0 %v651
    %715 = vmatpush1.bf16.msra.mxu0 %v650
    %716 = vmatprep.mubr.bf16.mxu0 %v477
    %717 = vmatmul.mubr.bf16.gmra.mrb[0].mxu0 %v476
    %v718 = vpop.f32.mrb[0].mxu0
    %v719 = vadd.f32 %v517, %v718
    %v720 = vpop.f32.mrb[0].mxu0
    %v721 = vadd.f32 %v521, %v720
    %v722 = vpop.f32.mrb[0].mxu0
    %v723 = vpop.f32.mrb[0].mxu0
    %724 = vdwg.mxu0
    %vm725 = vcmp.gt.f32.partialorder %v719, 0.0
    %vm726 = vcmp.gt.f32.partialorder %v721, 0.0
    %v727 = vmul.f32 %v719, 0.2
    %v728 = vmul.f32 %v721, 0.2
    %v729 = vsel %vm725, %v719, %v727
    %v730 = vsel %vm726, %v721, %v728
    %v731 = vpack.c.bf16 %v729, %v729
    %v732 = vpack.c.bf16 %v730, %v730
    %s733 = scalar_lea.vmem [#allocation5], 512
    %v734 = vld [vmem:[%s733] sm:$0xff]
    %v735 = vld [vmem:[%s733 + $0x8] sm:$0xff]
    %v736 = vld [vmem:[%s733 + $0x10] sm:$0xff]
    %v737 = vld [vmem:[%s733 + $0x18] sm:$0xff]
    %v738 = vld [vmem:[%s733 + $0x20] sm:$0xff]
    %v739 = vld [vmem:[%s733 + $0x28] sm:$0xff]
    %v740 = vld [vmem:[%s733 + $0x30] sm:$0xff]
    %v741 = vld [vmem:[%s733 + $0x38] sm:$0xff]
    %v742 = vld [vmem:[%s733 + $0x40] sm:$0xff]
    %v743 = vld [vmem:[%s733 + $0x48] sm:$0xff]
    %v744 = vld [vmem:[%s733 + $0x50] sm:$0xff]
    %v745 = vld [vmem:[%s733 + $0x58] sm:$0xff]
    %v746 = vld [vmem:[%s733 + $0x60] sm:$0xff]
    %v747 = vld [vmem:[%s733 + $0x68] sm:$0xff]
    %v748 = vld [vmem:[%s733 + $0x70] sm:$0xff]
    %v749 = vld [vmem:[%s733 + $0x78] sm:$0xff]
    %v750 = vld [vmem:[%s733 + $0x80] sm:$0xff]
    %v751 = vld [vmem:[%s733 + $0x88] sm:$0xff]
    %v752 = vld [vmem:[%s733 + $0x90] sm:$0xff]
    %v753 = vld [vmem:[%s733 + $0x98] sm:$0xff]
    %v754 = vld [vmem:[%s733 + $0xa0] sm:$0xff]
    %v755 = vld [vmem:[%s733 + $0xa8] sm:$0xff]
    %v756 = vld [vmem:[%s733 + $0xb0] sm:$0xff]
    %v757 = vld [vmem:[%s733 + $0xb8] sm:$0xff]
    %v758 = vld [vmem:[%s733 + $0xc0] sm:$0xff]
    %v759 = vld [vmem:[%s733 + $0xc8] sm:$0xff]
    %v760 = vld [vmem:[%s733 + $0xd0] sm:$0xff]
    %v761 = vld [vmem:[%s733 + $0xd8] sm:$0xff]
    %v762 = vld [vmem:[%s733 + $0xe0] sm:$0xff]
    %v763 = vld [vmem:[%s733 + $0xe8] sm:$0xff]
    %v764 = vld [vmem:[%s733 + $0xf0] sm:$0xff]
    %v765 = vld [vmem:[%s733 + $0xf8] sm:$0xff]
    %s766 = scalar_lea.vmem %s4, 3
    %v767 = vld [vmem:[%s766] ss:$8 sm:$0x3]
    %v769 = vlaneseq
    %v770 = vshrl.u32 %v769, 7
    %v771 = vsub.s32 0, %v770
    %v772 = vrot.slane %v767, %v771
    %v773 = vlaneseq
    %v774 = vshrl.u32 %v773, 7
    %v775 = vsub.s32 1, %v774
    %v776 = vrot.slane %v767, %v775
    %v811 = vunpack.c.l.b16 %v734
    %v812 = vunpack.c.h.b16 %v734
    %v813 = vunpack.c.l.b16 %v735
    %v814 = vunpack.c.h.b16 %v735
    %v815 = vunpack.c.l.b16 %v736
    %v816 = vunpack.c.h.b16 %v736
    %v817 = vunpack.c.l.b16 %v737
    %v818 = vunpack.c.h.b16 %v737
    %v819 = vunpack.c.l.b16 %v738
    %v820 = vunpack.c.h.b16 %v738
    %v821 = vunpack.c.l.b16 %v739
    %v822 = vunpack.c.h.b16 %v739
    %v823 = vunpack.c.l.b16 %v740
    %v824 = vunpack.c.h.b16 %v740
    %v825 = vunpack.c.l.b16 %v741
    %v826 = vunpack.c.h.b16 %v741
    %v827 = vunpack.c.l.b16 %v742
    %v828 = vunpack.c.h.b16 %v742
    %v829 = vunpack.c.l.b16 %v743
    %v830 = vunpack.c.h.b16 %v743
    %v831 = vunpack.c.l.b16 %v744
    %v832 = vunpack.c.h.b16 %v744
    %v833 = vunpack.c.l.b16 %v745
    %v834 = vunpack.c.h.b16 %v745
    %v835 = vunpack.c.l.b16 %v746
    %v836 = vunpack.c.h.b16 %v746
    %v837 = vunpack.c.l.b16 %v747
    %v838 = vunpack.c.h.b16 %v747
    %v839 = vunpack.c.l.b16 %v748
    %v840 = vunpack.c.h.b16 %v748
    %v841 = vunpack.c.l.b16 %v749
    %v842 = vunpack.c.h.b16 %v749
    %v843 = vunpack.c.l.b16 %v750
    %v844 = vunpack.c.h.b16 %v750
    %v845 = vunpack.c.l.b16 %v751
    %v846 = vunpack.c.h.b16 %v751
    %v847 = vunpack.c.l.b16 %v752
    %v848 = vunpack.c.h.b16 %v752
    %v849 = vunpack.c.l.b16 %v753
    %v850 = vunpack.c.h.b16 %v753
    %v851 = vunpack.c.l.b16 %v754
    %v852 = vunpack.c.h.b16 %v754
    %v853 = vunpack.c.l.b16 %v755
    %v854 = vunpack.c.h.b16 %v755
    %v855 = vunpack.c.l.b16 %v756
    %v856 = vunpack.c.h.b16 %v756
    %v857 = vunpack.c.l.b16 %v757
    %v858 = vunpack.c.h.b16 %v757
    %v859 = vunpack.c.l.b16 %v758
    %v860 = vunpack.c.h.b16 %v758
    %v861 = vunpack.c.l.b16 %v759
    %v862 = vunpack.c.h.b16 %v759
    %v863 = vunpack.c.l.b16 %v760
    %v864 = vunpack.c.h.b16 %v760
    %v865 = vunpack.c.l.b16 %v761
    %v866 = vunpack.c.h.b16 %v761
    %v867 = vunpack.c.l.b16 %v762
    %v868 = vunpack.c.h.b16 %v762
    %v869 = vunpack.c.l.b16 %v763
    %v870 = vunpack.c.h.b16 %v763
    %v871 = vunpack.c.l.b16 %v764
    %v872 = vunpack.c.h.b16 %v764
    %v873 = vunpack.c.l.b16 %v765
    %v874 = vunpack.c.h.b16 %v765
    %v875 = vpack.c.b16 %v813, %v811
    %v876 = vpack.c.b16 %v814, %v812
    %v877 = vpack.c.b16 %v817, %v815
    %v878 = vpack.c.b16 %v818, %v816
    %v879 = vpack.c.b16 %v821, %v819
    %v880 = vpack.c.b16 %v822, %v820
    %v881 = vpack.c.b16 %v825, %v823
    %v882 = vpack.c.b16 %v826, %v824
    %v883 = vpack.c.b16 %v829, %v827
    %v884 = vpack.c.b16 %v830, %v828
    %v885 = vpack.c.b16 %v833, %v831
    %v886 = vpack.c.b16 %v834, %v832
    %v887 = vpack.c.b16 %v837, %v835
    %v888 = vpack.c.b16 %v838, %v836
    %v889 = vpack.c.b16 %v841, %v839
    %v890 = vpack.c.b16 %v842, %v840
    %v891 = vpack.c.b16 %v845, %v843
    %v892 = vpack.c.b16 %v846, %v844
    %v893 = vpack.c.b16 %v849, %v847
    %v894 = vpack.c.b16 %v850, %v848
    %v895 = vpack.c.b16 %v853, %v851
    %v896 = vpack.c.b16 %v854, %v852
    %v897 = vpack.c.b16 %v857, %v855
    %v898 = vpack.c.b16 %v858, %v856
    %v899 = vpack.c.b16 %v861, %v859
    %v900 = vpack.c.b16 %v862, %v860
    %v901 = vpack.c.b16 %v865, %v863
    %v902 = vpack.c.b16 %v866, %v864
    %v903 = vpack.c.b16 %v869, %v867
    %v904 = vpack.c.b16 %v870, %v868
    %v905 = vpack.c.b16 %v873, %v871
    %v906 = vpack.c.b16 %v874, %v872
    %939 = vmatprep.subr.bf16.mxu0 %v876
    %940 = vmatpush1.bf16.msra.mxu0 %v875
    %941 = vmatprep.subr.bf16.mxu0 %v878
    %942 = vmatpush1.bf16.msra.mxu0 %v877
    %943 = vmatprep.subr.bf16.mxu0 %v880
    %944 = vmatpush1.bf16.msra.mxu0 %v879
    %945 = vmatprep.subr.bf16.mxu0 %v882
    %946 = vmatpush1.bf16.msra.mxu0 %v881
    %947 = vmatprep.subr.bf16.mxu0 %v884
    %948 = vmatpush1.bf16.msra.mxu0 %v883
    %949 = vmatprep.subr.bf16.mxu0 %v886
    %950 = vmatpush1.bf16.msra.mxu0 %v885
    %951 = vmatprep.subr.bf16.mxu0 %v888
    %952 = vmatpush1.bf16.msra.mxu0 %v887
    %953 = vmatprep.subr.bf16.mxu0 %v890
    %954 = vmatpush1.bf16.msra.mxu0 %v889
    %955 = vmatprep.subr.bf16.mxu0 %v892
    %956 = vmatpush1.bf16.msra.mxu0 %v891
    %957 = vmatprep.subr.bf16.mxu0 %v894
    %958 = vmatpush1.bf16.msra.mxu0 %v893
    %959 = vmatprep.subr.bf16.mxu0 %v896
    %960 = vmatpush1.bf16.msra.mxu0 %v895
    %961 = vmatprep.subr.bf16.mxu0 %v898
    %962 = vmatpush1.bf16.msra.mxu0 %v897
    %963 = vmatprep.subr.bf16.mxu0 %v900
    %964 = vmatpush1.bf16.msra.mxu0 %v899
    %965 = vmatprep.subr.bf16.mxu0 %v902
    %966 = vmatpush1.bf16.msra.mxu0 %v901
    %967 = vmatprep.subr.bf16.mxu0 %v904
    %968 = vmatpush1.bf16.msra.mxu0 %v903
    %969 = vmatprep.subr.bf16.mxu0 %v906
    %970 = vmatpush1.bf16.msra.mxu0 %v905
    %971 = vmatprep.mubr.bf16.mxu0 %v732
    %972 = vmatmul.mubr.bf16.gmra.mrb[0].mxu0 %v731
    %v973 = vpop.f32.mrb[0].mxu0
    %v974 = vadd.f32 %v772, %v973
    %v975 = vpop.f32.mrb[0].mxu0
    %v976 = vadd.f32 %v776, %v975
    %v977 = vpop.f32.mrb[0].mxu0
    %v978 = vpop.f32.mrb[0].mxu0
    %979 = vdwg.mxu0
    %vm980 = vcmp.gt.f32.partialorder %v974, 0.0
    %vm981 = vcmp.gt.f32.partialorder %v976, 0.0
    %v982 = vmul.f32 %v974, 0.2
    %v983 = vmul.f32 %v976, 0.2
    %v984 = vsel %vm980, %v974, %v982
    %v985 = vsel %vm981, %v976, %v983
    %v986 = vpack.c.bf16 %v984, %v984
    %v987 = vpack.c.bf16 %v985, %v985
    %s988 = scalar_lea.vmem [#allocation5], 768
    %v989 = vld [vmem:[%s988] sm:$0xff]
    %v990 = vld [vmem:[%s988 + $0x8] sm:$0xff]
    %v991 = vld [vmem:[%s988 + $0x10] sm:$0xff]
    %v992 = vld [vmem:[%s988 + $0x18] sm:$0xff]
    %v993 = vld [vmem:[%s988 + $0x20] sm:$0xff]
    %v994 = vld [vmem:[%s988 + $0x28] sm:$0xff]
    %v995 = vld [vmem:[%s988 + $0x30] sm:$0xff]
    %v996 = vld [vmem:[%s988 + $0x38] sm:$0xff]
    %v997 = vld [vmem:[%s988 + $0x40] sm:$0xff]
    %v998 = vld [vmem:[%s988 + $0x48] sm:$0xff]
    %v999 = vld [vmem:[%s988 + $0x50] sm:$0xff]
    %v1000 = vld [vmem:[%s988 + $0x58] sm:$0xff]
    %v1001 = vld [vmem:[%s988 + $0x60] sm:$0xff]
    %v1002 = vld [vmem:[%s988 + $0x68] sm:$0xff]
    %v1003 = vld [vmem:[%s988 + $0x70] sm:$0xff]
    %v1004 = vld [vmem:[%s988 + $0x78] sm:$0xff]
    %v1005 = vld [vmem:[%s988 + $0x80] sm:$0xff]
    %v1006 = vld [vmem:[%s988 + $0x88] sm:$0xff]
    %v1007 = vld [vmem:[%s988 + $0x90] sm:$0xff]
    %v1008 = vld [vmem:[%s988 + $0x98] sm:$0xff]
    %v1009 = vld [vmem:[%s988 + $0xa0] sm:$0xff]
    %v1010 = vld [vmem:[%s988 + $0xa8] sm:$0xff]
    %v1011 = vld [vmem:[%s988 + $0xb0] sm:$0xff]
    %v1012 = vld [vmem:[%s988 + $0xb8] sm:$0xff]
    %v1013 = vld [vmem:[%s988 + $0xc0] sm:$0xff]
    %v1014 = vld [vmem:[%s988 + $0xc8] sm:$0xff]
    %v1015 = vld [vmem:[%s988 + $0xd0] sm:$0xff]
    %v1016 = vld [vmem:[%s988 + $0xd8] sm:$0xff]
    %v1017 = vld [vmem:[%s988 + $0xe0] sm:$0xff]
    %v1018 = vld [vmem:[%s988 + $0xe8] sm:$0xff]
    %v1019 = vld [vmem:[%s988 + $0xf0] sm:$0xff]
    %v1020 = vld [vmem:[%s988 + $0xf8] sm:$0xff]
    %s1021 = scalar_lea.vmem %s4, 4
    %v1022 = vld [vmem:[%s1021] ss:$8 sm:$0x3]
    %v1024 = vlaneseq
    %v1025 = vshrl.u32 %v1024, 7
    %v1026 = vsub.s32 0, %v1025
    %v1027 = vrot.slane %v1022, %v1026
    %v1028 = vlaneseq
    %v1029 = vshrl.u32 %v1028, 7
    %v1030 = vsub.s32 1, %v1029
    %v1031 = vrot.slane %v1022, %v1030
    %v1066 = vunpack.c.l.b16 %v989
    %v1067 = vunpack.c.h.b16 %v989
    %v1068 = vunpack.c.l.b16 %v990
    %v1069 = vunpack.c.h.b16 %v990
    %v1070 = vunpack.c.l.b16 %v991
    %v1071 = vunpack.c.h.b16 %v991
    %v1072 = vunpack.c.l.b16 %v992
    %v1073 = vunpack.c.h.b16 %v992
    %v1074 = vunpack.c.l.b16 %v993
    %v1075 = vunpack.c.h.b16 %v993
    %v1076 = vunpack.c.l.b16 %v994
    %v1077 = vunpack.c.h.b16 %v994
    %v1078 = vunpack.c.l.b16 %v995
    %v1079 = vunpack.c.h.b16 %v995
    %v1080 = vunpack.c.l.b16 %v996
    %v1081 = vunpack.c.h.b16 %v996
    %v1082 = vunpack.c.l.b16 %v997
    %v1083 = vunpack.c.h.b16 %v997
    %v1084 = vunpack.c.l.b16 %v998
    %v1085 = vunpack.c.h.b16 %v998
    %v1086 = vunpack.c.l.b16 %v999
    %v1087 = vunpack.c.h.b16 %v999
    %v1088 = vunpack.c.l.b16 %v1000
    %v1089 = vunpack.c.h.b16 %v1000
    %v1090 = vunpack.c.l.b16 %v1001
    %v1091 = vunpack.c.h.b16 %v1001
    %v1092 = vunpack.c.l.b16 %v1002
    %v1093 = vunpack.c.h.b16 %v1002
    %v1094 = vunpack.c.l.b16 %v1003
    %v1095 = vunpack.c.h.b16 %v1003
    %v1096 = vunpack.c.l.b16 %v1004
    %v1097 = vunpack.c.h.b16 %v1004
    %v1098 = vunpack.c.l.b16 %v1005
    %v1099 = vunpack.c.h.b16 %v1005
    %v1100 = vunpack.c.l.b16 %v1006
    %v1101 = vunpack.c.h.b16 %v1006
    %v1102 = vunpack.c.l.b16 %v1007
    %v1103 = vunpack.c.h.b16 %v1007
    %v1104 = vunpack.c.l.b16 %v1008
    %v1105 = vunpack.c.h.b16 %v1008
    %v1106 = vunpack.c.l.b16 %v1009
    %v1107 = vunpack.c.h.b16 %v1009
    %v1108 = vunpack.c.l.b16 %v1010
    %v1109 = vunpack.c.h.b16 %v1010
    %v1110 = vunpack.c.l.b16 %v1011
    %v1111 = vunpack.c.h.b16 %v1011
    %v1112 = vunpack.c.l.b16 %v1012
    %v1113 = vunpack.c.h.b16 %v1012
    %v1114 = vunpack.c.l.b16 %v1013
    %v1115 = vunpack.c.h.b16 %v1013
    %v1116 = vunpack.c.l.b16 %v1014
    %v1117 = vunpack.c.h.b16 %v1014
    %v1118 = vunpack.c.l.b16 %v1015
    %v1119 = vunpack.c.h.b16 %v1015
    %v1120 = vunpack.c.l.b16 %v1016
    %v1121 = vunpack.c.h.b16 %v1016
    %v1122 = vunpack.c.l.b16 %v1017
    %v1123 = vunpack.c.h.b16 %v1017
    %v1124 = vunpack.c.l.b16 %v1018
    %v1125 = vunpack.c.h.b16 %v1018
    %v1126 = vunpack.c.l.b16 %v1019
    %v1127 = vunpack.c.h.b16 %v1019
    %v1128 = vunpack.c.l.b16 %v1020
    %v1129 = vunpack.c.h.b16 %v1020
    %v1130 = vpack.c.b16 %v1068, %v1066
    %v1131 = vpack.c.b16 %v1069, %v1067
    %v1132 = vpack.c.b16 %v1072, %v1070
    %v1133 = vpack.c.b16 %v1073, %v1071
    %v1134 = vpack.c.b16 %v1076, %v1074
    %v1135 = vpack.c.b16 %v1077, %v1075
    %v1136 = vpack.c.b16 %v1080, %v1078
    %v1137 = vpack.c.b16 %v1081, %v1079
    %v1138 = vpack.c.b16 %v1084, %v1082
    %v1139 = vpack.c.b16 %v1085, %v1083
    %v1140 = vpack.c.b16 %v1088, %v1086
    %v1141 = vpack.c.b16 %v1089, %v1087
    %v1142 = vpack.c.b16 %v1092, %v1090
    %v1143 = vpack.c.b16 %v1093, %v1091
    %v1144 = vpack.c.b16 %v1096, %v1094
    %v1145 = vpack.c.b16 %v1097, %v1095
    %v1146 = vpack.c.b16 %v1100, %v1098
    %v1147 = vpack.c.b16 %v1101, %v1099
    %v1148 = vpack.c.b16 %v1104, %v1102
    %v1149 = vpack.c.b16 %v1105, %v1103
    %v1150 = vpack.c.b16 %v1108, %v1106
    %v1151 = vpack.c.b16 %v1109, %v1107
    %v1152 = vpack.c.b16 %v1112, %v1110
    %v1153 = vpack.c.b16 %v1113, %v1111
    %v1154 = vpack.c.b16 %v1116, %v1114
    %v1155 = vpack.c.b16 %v1117, %v1115
    %v1156 = vpack.c.b16 %v1120, %v1118
    %v1157 = vpack.c.b16 %v1121, %v1119
    %v1158 = vpack.c.b16 %v1124, %v1122
    %v1159 = vpack.c.b16 %v1125, %v1123
    %v1160 = vpack.c.b16 %v1128, %v1126
    %v1161 = vpack.c.b16 %v1129, %v1127
    %1194 = vmatprep.subr.bf16.mxu0 %v1131
    %1195 = vmatpush1.bf16.msra.mxu0 %v1130
    %1196 = vmatprep.subr.bf16.mxu0 %v1133
    %1197 = vmatpush1.bf16.msra.mxu0 %v1132
    %1198 = vmatprep.subr.bf16.mxu0 %v1135
    %1199 = vmatpush1.bf16.msra.mxu0 %v1134
    %1200 = vmatprep.subr.bf16.mxu0 %v1137
    %1201 = vmatpush1.bf16.msra.mxu0 %v1136
    %1202 = vmatprep.subr.bf16.mxu0 %v1139
    %1203 = vmatpush1.bf16.msra.mxu0 %v1138
    %1204 = vmatprep.subr.bf16.mxu0 %v1141
    %1205 = vmatpush1.bf16.msra.mxu0 %v1140
    %1206 = vmatprep.subr.bf16.mxu0 %v1143
    %1207 = vmatpush1.bf16.msra.mxu0 %v1142
    %1208 = vmatprep.subr.bf16.mxu0 %v1145
    %1209 = vmatpush1.bf16.msra.mxu0 %v1144
    %1210 = vmatprep.subr.bf16.mxu0 %v1147
    %1211 = vmatpush1.bf16.msra.mxu0 %v1146
    %1212 = vmatprep.subr.bf16.mxu0 %v1149
    %1213 = vmatpush1.bf16.msra.mxu0 %v1148
    %1214 = vmatprep.subr.bf16.mxu0 %v1151
    %1215 = vmatpush1.bf16.msra.mxu0 %v1150
    %1216 = vmatprep.subr.bf16.mxu0 %v1153
    %1217 = vmatpush1.bf16.msra.mxu0 %v1152
    %1218 = vmatprep.subr.bf16.mxu0 %v1155
    %1219 = vmatpush1.bf16.msra.mxu0 %v1154
    %1220 = vmatprep.subr.bf16.mxu0 %v1157
    %1221 = vmatpush1.bf16.msra.mxu0 %v1156
    %1222 = vmatprep.subr.bf16.mxu0 %v1159
    %1223 = vmatpush1.bf16.msra.mxu0 %v1158
    %1224 = vmatprep.subr.bf16.mxu0 %v1161
    %1225 = vmatpush1.bf16.msra.mxu0 %v1160
    %1226 = vmatprep.mubr.bf16.mxu0 %v987
    %1227 = vmatmul.mubr.bf16.gmra.mrb[0].mxu0 %v986
    %v1228 = vpop.f32.mrb[0].mxu0
    %v1229 = vadd.f32 %v1027, %v1228
    %v1230 = vpop.f32.mrb[0].mxu0
    %v1231 = vadd.f32 %v1031, %v1230
    %v1232 = vpop.f32.mrb[0].mxu0
    %v1233 = vpop.f32.mrb[0].mxu0
    %1234 = vdwg.mxu0
    %vm1235 = vcmp.gt.f32.partialorder %v1229, 0.0
    %vm1236 = vcmp.gt.f32.partialorder %v1231, 0.0
    %v1237 = vmul.f32 %v1229, 0.2
    %v1238 = vmul.f32 %v1231, 0.2
    %v1239 = vsel %vm1235, %v1229, %v1237
    %v1240 = vsel %vm1236, %v1231, %v1238
    %v1241 = vpack.c.bf16 %v1239, %v1239
    %v1242 = vpack.c.bf16 %v1240, %v1240
    %v1243 = vld [vmem:[#allocation7] sm:$0xff]
    %v1244 = vld [vmem:[#allocation7 + $0x8] sm:$0xff]
    %v1245 = vld [vmem:[#allocation7 + $0x10] sm:$0xff]
    %v1246 = vld [vmem:[#allocation7 + $0x18] sm:$0xf]
    %v1247 = vld [vmem:[#allocation7 + $0x1c] sm:$0xff]
    %v1248 = vld [vmem:[#allocation7 + $0x24] sm:$0xff]
    %v1249 = vld [vmem:[#allocation7 + $0x2c] sm:$0xff]
    %v1250 = vld [vmem:[#allocation7 + $0x34] sm:$0xf]
    %v1251 = vld [vmem:[#allocation7 + $0x38] sm:$0xff]
    %v1252 = vld [vmem:[#allocation7 + $0x40] sm:$0xff]
    %v1253 = vld [vmem:[#allocation7 + $0x48] sm:$0xff]
    %v1254 = vld [vmem:[#allocation7 + $0x50] sm:$0xf]
    %v1255 = vld [vmem:[#allocation7 + $0x54] sm:$0xff]
    %v1256 = vld [vmem:[#allocation7 + $0x5c] sm:$0xff]
    %v1257 = vld [vmem:[#allocation7 + $0x64] sm:$0xff]
    %v1258 = vld [vmem:[#allocation7 + $0x6c] sm:$0xf]
    %v1259 = vld [vmem:[#allocation7 + $0x70] sm:$0xff]
    %v1260 = vld [vmem:[#allocation7 + $0x78] sm:$0xff]
    %v1261 = vld [vmem:[#allocation7 + $0x80] sm:$0xff]
    %v1262 = vld [vmem:[#allocation7 + $0x88] sm:$0xf]
    %v1263 = vld [vmem:[#allocation7 + $0x8c] sm:$0xff]
    %v1264 = vld [vmem:[#allocation7 + $0x94] sm:$0xff]
    %v1265 = vld [vmem:[#allocation7 + $0x9c] sm:$0xff]
    %v1266 = vld [vmem:[#allocation7 + $0xa4] sm:$0xf]
    %v1267 = vld [vmem:[#allocation7 + $0xa8] sm:$0xff]
    %v1268 = vld [vmem:[#allocation7 + $0xb0] sm:$0xff]
    %v1269 = vld [vmem:[#allocation7 + $0xb8] sm:$0xff]
    %v1270 = vld [vmem:[#allocation7 + $0xc0] sm:$0xf]
    %v1271 = vld [vmem:[#allocation7 + $0xc4] sm:$0xff]
    %v1272 = vld [vmem:[#allocation7 + $0xcc] sm:$0xff]
    %v1273 = vld [vmem:[#allocation7 + $0xd4] sm:$0xff]
    %v1274 = vld [vmem:[#allocation7 + $0xdc] sm:$0xf]
    %v1275 = vld [vmem:[#allocation7 + $0xe0] sm:$0xff]
    %v1276 = vld [vmem:[#allocation7 + $0xe8] sm:$0xff]
    %v1277 = vld [vmem:[#allocation7 + $0xf0] sm:$0xff]
    %v1278 = vld [vmem:[#allocation7 + $0xf8] sm:$0xf]
    %v1279 = vld [vmem:[#allocation7 + $0xfc] sm:$0xff]
    %v1280 = vld [vmem:[#allocation7 + $0x104] sm:$0xff]
    %v1281 = vld [vmem:[#allocation7 + $0x10c] sm:$0xff]
    %v1282 = vld [vmem:[#allocation7 + $0x114] sm:$0xf]
    %v1283 = vld [vmem:[#allocation7 + $0x118] sm:$0xff]
    %v1284 = vld [vmem:[#allocation7 + $0x120] sm:$0xff]
    %v1285 = vld [vmem:[#allocation7 + $0x128] sm:$0xff]
    %v1286 = vld [vmem:[#allocation7 + $0x130] sm:$0xf]
    %v1287 = vld [vmem:[#allocation7 + $0x134] sm:$0xff]
    %v1288 = vld [vmem:[#allocation7 + $0x13c] sm:$0xff]
    %v1289 = vld [vmem:[#allocation7 + $0x144] sm:$0xff]
    %v1290 = vld [vmem:[#allocation7 + $0x14c] sm:$0xf]
    %v1291 = vld [vmem:[#allocation7 + $0x150] sm:$0xff]
    %v1292 = vld [vmem:[#allocation7 + $0x158] sm:$0xff]
    %v1293 = vld [vmem:[#allocation7 + $0x160] sm:$0xff]
    %v1294 = vld [vmem:[#allocation7 + $0x168] sm:$0xf]
    %v1295 = vld [vmem:[#allocation7 + $0x16c] sm:$0xff]
    %v1296 = vld [vmem:[#allocation7 + $0x174] sm:$0xff]
    %v1297 = vld [vmem:[#allocation7 + $0x17c] sm:$0xff]
    %v1298 = vld [vmem:[#allocation7 + $0x184] sm:$0xf]
    %v1299 = vld [vmem:[#allocation7 + $0x188] sm:$0xff]
    %v1300 = vld [vmem:[#allocation7 + $0x190] sm:$0xff]
    %v1301 = vld [vmem:[#allocation7 + $0x198] sm:$0xff]
    %v1302 = vld [vmem:[#allocation7 + $0x1a0] sm:$0xf]
    %v1303 = vld [vmem:[#allocation7 + $0x1a4] sm:$0xff]
    %v1304 = vld [vmem:[#allocation7 + $0x1ac] sm:$0xff]
    %v1305 = vld [vmem:[#allocation7 + $0x1b4] sm:$0xff]
    %v1306 = vld [vmem:[#allocation7 + $0x1bc] sm:$0xf]
    %v1307 = vld [vmem:[#allocation7 + $0x1c0] sm:$0xff]
    %v1308 = vld [vmem:[#allocation7 + $0x1c8] sm:$0xff]
    %v1309 = vld [vmem:[#allocation7 + $0x1d0] sm:$0xff]
    %v1310 = vld [vmem:[#allocation7 + $0x1d8] sm:$0xf]
    %v1311 = vld [vmem:[#allocation7 + $0x1dc] sm:$0xff]
    %v1312 = vld [vmem:[#allocation7 + $0x1e4] sm:$0xff]
    %v1313 = vld [vmem:[#allocation7 + $0x1ec] sm:$0xff]
    %v1314 = vld [vmem:[#allocation7 + $0x1f4] sm:$0xf]
    %v1315 = vld [vmem:[#allocation7 + $0x1f8] sm:$0xff]
    %v1316 = vld [vmem:[#allocation7 + $0x200] sm:$0xff]
    %v1317 = vld [vmem:[#allocation7 + $0x208] sm:$0xff]
    %v1318 = vld [vmem:[#allocation7 + $0x210] sm:$0xf]
    %v1319 = vld [vmem:[#allocation7 + $0x214] sm:$0xff]
    %v1320 = vld [vmem:[#allocation7 + $0x21c] sm:$0xff]
    %v1321 = vld [vmem:[#allocation7 + $0x224] sm:$0xff]
    %v1322 = vld [vmem:[#allocation7 + $0x22c] sm:$0xf]
    %v1323 = vld [vmem:[#allocation7 + $0x230] sm:$0xff]
    %v1324 = vld [vmem:[#allocation7 + $0x238] sm:$0xff]
    %v1325 = vld [vmem:[#allocation7 + $0x240] sm:$0xff]
    %v1326 = vld [vmem:[#allocation7 + $0x248] sm:$0xf]
    %v1327 = vld [vmem:[#allocation7 + $0x24c] sm:$0xff]
    %v1328 = vld [vmem:[#allocation7 + $0x254] sm:$0xff]
    %v1329 = vld [vmem:[#allocation7 + $0x25c] sm:$0xff]
    %v1330 = vld [vmem:[#allocation7 + $0x264] sm:$0xf]
    %v1331 = vld [vmem:[#allocation7 + $0x268] sm:$0xff]
    %v1332 = vld [vmem:[#allocation7 + $0x270] sm:$0xff]
    %v1333 = vld [vmem:[#allocation7 + $0x278] sm:$0xff]
    %v1334 = vld [vmem:[#allocation7 + $0x280] sm:$0xf]
    %v1335 = vld [vmem:[#allocation7 + $0x284] sm:$0xff]
    %v1336 = vld [vmem:[#allocation7 + $0x28c] sm:$0xff]
    %v1337 = vld [vmem:[#allocation7 + $0x294] sm:$0xff]
    %v1338 = vld [vmem:[#allocation7 + $0x29c] sm:$0xf]
    %v1339 = vld [vmem:[#allocation7 + $0x2a0] sm:$0xff]
    %v1340 = vld [vmem:[#allocation7 + $0x2a8] sm:$0xff]
    %v1341 = vld [vmem:[#allocation7 + $0x2b0] sm:$0xff]
    %v1342 = vld [vmem:[#allocation7 + $0x2b8] sm:$0xf]
    %v1343 = vld [vmem:[#allocation7 + $0x2bc] sm:$0xff]
    %v1344 = vld [vmem:[#allocation7 + $0x2c4] sm:$0xff]
    %v1345 = vld [vmem:[#allocation7 + $0x2cc] sm:$0xff]
    %v1346 = vld [vmem:[#allocation7 + $0x2d4] sm:$0xf]
    %v1347 = vld [vmem:[#allocation7 + $0x2d8] sm:$0xff]
    %v1348 = vld [vmem:[#allocation7 + $0x2e0] sm:$0xff]
    %v1349 = vld [vmem:[#allocation7 + $0x2e8] sm:$0xff]
    %v1350 = vld [vmem:[#allocation7 + $0x2f0] sm:$0xf]
    %v1351 = vld [vmem:[#allocation7 + $0x2f4] sm:$0xff]
    %v1352 = vld [vmem:[#allocation7 + $0x2fc] sm:$0xff]
    %v1353 = vld [vmem:[#allocation7 + $0x304] sm:$0xff]
    %v1354 = vld [vmem:[#allocation7 + $0x30c] sm:$0xf]
    %v1355 = vld [vmem:[#allocation7 + $0x310] sm:$0xff]
    %v1356 = vld [vmem:[#allocation7 + $0x318] sm:$0xff]
    %v1357 = vld [vmem:[#allocation7 + $0x320] sm:$0xff]
    %v1358 = vld [vmem:[#allocation7 + $0x328] sm:$0xf]
    %v1359 = vld [vmem:[#allocation7 + $0x32c] sm:$0xff]
    %v1360 = vld [vmem:[#allocation7 + $0x334] sm:$0xff]
    %v1361 = vld [vmem:[#allocation7 + $0x33c] sm:$0xff]
    %v1362 = vld [vmem:[#allocation7 + $0x344] sm:$0xf]
    %v1363 = vld [vmem:[#allocation7 + $0x348] sm:$0xff]
    %v1364 = vld [vmem:[#allocation7 + $0x350] sm:$0xff]
    %v1365 = vld [vmem:[#allocation7 + $0x358] sm:$0xff]
    %v1366 = vld [vmem:[#allocation7 + $0x360] sm:$0xf]
    %v1367 = vld [vmem:[#allocation7 + $0x364] sm:$0xff]
    %v1368 = vld [vmem:[#allocation7 + $0x36c] sm:$0xff]
    %v1369 = vld [vmem:[#allocation7 + $0x374] sm:$0xff]
    %v1370 = vld [vmem:[#allocation7 + $0x37c] sm:$0xf]
    %v1371 = vld [vmem:[%s5] sm:$0xff]
    %v1373 = vlaneseq
    %v1374 = vshrl.u32 %v1373, 7
    %v1375 = vsub.s32 0, %v1374
    %v1376 = vrot.slane %v1371, %v1375
    %v1377 = vlaneseq
    %v1378 = vshrl.u32 %v1377, 7
    %v1379 = vsub.s32 1, %v1378
    %v1380 = vrot.slane %v1371, %v1379
    %v1381 = vlaneseq
    %v1382 = vshrl.u32 %v1381, 7
    %v1383 = vsub.s32 2, %v1382
    %v1384 = vrot.slane %v1371, %v1383
    %v1385 = vlaneseq
    %v1386 = vshrl.u32 %v1385, 7
    %v1387 = vsub.s32 3, %v1386
    %v1388 = vrot.slane %v1371, %v1387
    %v1389 = vlaneseq
    %v1390 = vshrl.u32 %v1389, 7
    %v1391 = vsub.s32 4, %v1390
    %v1392 = vrot.slane %v1371, %v1391
    %v1393 = vlaneseq
    %v1394 = vshrl.u32 %v1393, 7
    %v1395 = vsub.s32 5, %v1394
    %v1396 = vrot.slane %v1371, %v1395
    %v1397 = vlaneseq
    %v1398 = vshrl.u32 %v1397, 7
    %v1399 = vsub.s32 6, %v1398
    %v1400 = vrot.slane %v1371, %v1399
    %v1536 = vunpack.c.l.b16 %v1243
    %v1537 = vunpack.c.h.b16 %v1243
    %v1538 = vunpack.c.l.b16 %v1244
    %v1539 = vunpack.c.h.b16 %v1244
    %v1540 = vunpack.c.l.b16 %v1245
    %v1541 = vunpack.c.h.b16 %v1245
    %v1542 = vunpack.c.l.b16 %v1246
    %v1543 = vunpack.c.l.b16 %v1247
    %v1544 = vunpack.c.h.b16 %v1247
    %v1545 = vunpack.c.l.b16 %v1248
    %v1546 = vunpack.c.h.b16 %v1248
    %v1547 = vunpack.c.l.b16 %v1249
    %v1548 = vunpack.c.h.b16 %v1249
    %v1549 = vunpack.c.l.b16 %v1250
    %v1550 = vunpack.c.l.b16 %v1251
    %v1551 = vunpack.c.h.b16 %v1251
    %v1552 = vunpack.c.l.b16 %v1252
    %v1553 = vunpack.c.h.b16 %v1252
    %v1554 = vunpack.c.l.b16 %v1253
    %v1555 = vunpack.c.h.b16 %v1253
    %v1556 = vunpack.c.l.b16 %v1254
    %v1557 = vunpack.c.l.b16 %v1255
    %v1558 = vunpack.c.h.b16 %v1255
    %v1559 = vunpack.c.l.b16 %v1256
    %v1560 = vunpack.c.h.b16 %v1256
    %v1561 = vunpack.c.l.b16 %v1257
    %v1562 = vunpack.c.h.b16 %v1257
    %v1563 = vunpack.c.l.b16 %v1258
    %v1564 = vunpack.c.l.b16 %v1259
    %v1565 = vunpack.c.h.b16 %v1259
    %v1566 = vunpack.c.l.b16 %v1260
    %v1567 = vunpack.c.h.b16 %v1260
    %v1568 = vunpack.c.l.b16 %v1261
    %v1569 = vunpack.c.h.b16 %v1261
    %v1570 = vunpack.c.l.b16 %v1262
    %v1571 = vunpack.c.l.b16 %v1263
    %v1572 = vunpack.c.h.b16 %v1263
    %v1573 = vunpack.c.l.b16 %v1264
    %v1574 = vunpack.c.h.b16 %v1264
    %v1575 = vunpack.c.l.b16 %v1265
    %v1576 = vunpack.c.h.b16 %v1265
    %v1577 = vunpack.c.l.b16 %v1266
    %v1578 = vunpack.c.l.b16 %v1267
    %v1579 = vunpack.c.h.b16 %v1267
    %v1580 = vunpack.c.l.b16 %v1268
    %v1581 = vunpack.c.h.b16 %v1268
    %v1582 = vunpack.c.l.b16 %v1269
    %v1583 = vunpack.c.h.b16 %v1269
    %v1584 = vunpack.c.l.b16 %v1270
    %v1585 = vunpack.c.l.b16 %v1271
    %v1586 = vunpack.c.h.b16 %v1271
    %v1587 = vunpack.c.l.b16 %v1272
    %v1588 = vunpack.c.h.b16 %v1272
    %v1589 = vunpack.c.l.b16 %v1273
    %v1590 = vunpack.c.h.b16 %v1273
    %v1591 = vunpack.c.l.b16 %v1274
    %v1592 = vunpack.c.l.b16 %v1275
    %v1593 = vunpack.c.h.b16 %v1275
    %v1594 = vunpack.c.l.b16 %v1276
    %v1595 = vunpack.c.h.b16 %v1276
    %v1596 = vunpack.c.l.b16 %v1277
    %v1597 = vunpack.c.h.b16 %v1277
    %v1598 = vunpack.c.l.b16 %v1278
    %v1599 = vunpack.c.l.b16 %v1279
    %v1600 = vunpack.c.h.b16 %v1279
    %v1601 = vunpack.c.l.b16 %v1280
    %v1602 = vunpack.c.h.b16 %v1280
    %v1603 = vunpack.c.l.b16 %v1281
    %v1604 = vunpack.c.h.b16 %v1281
    %v1605 = vunpack.c.l.b16 %v1282
    %v1606 = vunpack.c.l.b16 %v1283
    %v1607 = vunpack.c.h.b16 %v1283
    %v1608 = vunpack.c.l.b16 %v1284
    %v1609 = vunpack.c.h.b16 %v1284
    %v1610 = vunpack.c.l.b16 %v1285
    %v1611 = vunpack.c.h.b16 %v1285
    %v1612 = vunpack.c.l.b16 %v1286
    %v1613 = vunpack.c.l.b16 %v1287
    %v1614 = vunpack.c.h.b16 %v1287
    %v1615 = vunpack.c.l.b16 %v1288
    %v1616 = vunpack.c.h.b16 %v1288
    %v1617 = vunpack.c.l.b16 %v1289
    %v1618 = vunpack.c.h.b16 %v1289
    %v1619 = vunpack.c.l.b16 %v1290
    %v1620 = vunpack.c.l.b16 %v1291
    %v1621 = vunpack.c.h.b16 %v1291
    %v1622 = vunpack.c.l.b16 %v1292
    %v1623 = vunpack.c.h.b16 %v1292
    %v1624 = vunpack.c.l.b16 %v1293
    %v1625 = vunpack.c.h.b16 %v1293
    %v1626 = vunpack.c.l.b16 %v1294
    %v1627 = vunpack.c.l.b16 %v1295
    %v1628 = vunpack.c.h.b16 %v1295
    %v1629 = vunpack.c.l.b16 %v1296
    %v1630 = vunpack.c.h.b16 %v1296
    %v1631 = vunpack.c.l.b16 %v1297
    %v1632 = vunpack.c.h.b16 %v1297
    %v1633 = vunpack.c.l.b16 %v1298
    %v1634 = vunpack.c.l.b16 %v1299
    %v1635 = vunpack.c.h.b16 %v1299
    %v1636 = vunpack.c.l.b16 %v1300
    %v1637 = vunpack.c.h.b16 %v1300
    %v1638 = vunpack.c.l.b16 %v1301
    %v1639 = vunpack.c.h.b16 %v1301
    %v1640 = vunpack.c.l.b16 %v1302
    %v1641 = vunpack.c.l.b16 %v1303
    %v1642 = vunpack.c.h.b16 %v1303
    %v1643 = vunpack.c.l.b16 %v1304
    %v1644 = vunpack.c.h.b16 %v1304
    %v1645 = vunpack.c.l.b16 %v1305
    %v1646 = vunpack.c.h.b16 %v1305
    %v1647 = vunpack.c.l.b16 %v1306
    %v1648 = vunpack.c.l.b16 %v1307
    %v1649 = vunpack.c.h.b16 %v1307
    %v1650 = vunpack.c.l.b16 %v1308
    %v1651 = vunpack.c.h.b16 %v1308
    %v1652 = vunpack.c.l.b16 %v1309
    %v1653 = vunpack.c.h.b16 %v1309
    %v1654 = vunpack.c.l.b16 %v1310
    %v1655 = vunpack.c.l.b16 %v1311
    %v1656 = vunpack.c.h.b16 %v1311
    %v1657 = vunpack.c.l.b16 %v1312
    %v1658 = vunpack.c.h.b16 %v1312
    %v1659 = vunpack.c.l.b16 %v1313
    %v1660 = vunpack.c.h.b16 %v1313
    %v1661 = vunpack.c.l.b16 %v1314
    %v1662 = vunpack.c.l.b16 %v1315
    %v1663 = vunpack.c.h.b16 %v1315
    %v1664 = vunpack.c.l.b16 %v1316
    %v1665 = vunpack.c.h.b16 %v1316
    %v1666 = vunpack.c.l.b16 %v1317
    %v1667 = vunpack.c.h.b16 %v1317
    %v1668 = vunpack.c.l.b16 %v1318
    %v1669 = vunpack.c.l.b16 %v1319
    %v1670 = vunpack.c.h.b16 %v1319
    %v1671 = vunpack.c.l.b16 %v1320
    %v1672 = vunpack.c.h.b16 %v1320
    %v1673 = vunpack.c.l.b16 %v1321
    %v1674 = vunpack.c.h.b16 %v1321
    %v1675 = vunpack.c.l.b16 %v1322
    %v1676 = vunpack.c.l.b16 %v1323
    %v1677 = vunpack.c.h.b16 %v1323
    %v1678 = vunpack.c.l.b16 %v1324
    %v1679 = vunpack.c.h.b16 %v1324
    %v1680 = vunpack.c.l.b16 %v1325
    %v1681 = vunpack.c.h.b16 %v1325
    %v1682 = vunpack.c.l.b16 %v1326
    %v1683 = vunpack.c.l.b16 %v1327
    %v1684 = vunpack.c.h.b16 %v1327
    %v1685 = vunpack.c.l.b16 %v1328
    %v1686 = vunpack.c.h.b16 %v1328
    %v1687 = vunpack.c.l.b16 %v1329
    %v1688 = vunpack.c.h.b16 %v1329
    %v1689 = vunpack.c.l.b16 %v1330
    %v1690 = vunpack.c.l.b16 %v1331
    %v1691 = vunpack.c.h.b16 %v1331
    %v1692 = vunpack.c.l.b16 %v1332
    %v1693 = vunpack.c.h.b16 %v1332
    %v1694 = vunpack.c.l.b16 %v1333
    %v1695 = vunpack.c.h.b16 %v1333
    %v1696 = vunpack.c.l.b16 %v1334
    %v1697 = vunpack.c.l.b16 %v1335
    %v1698 = vunpack.c.h.b16 %v1335
    %v1699 = vunpack.c.l.b16 %v1336
    %v1700 = vunpack.c.h.b16 %v1336
    %v1701 = vunpack.c.l.b16 %v1337
    %v1702 = vunpack.c.h.b16 %v1337
    %v1703 = vunpack.c.l.b16 %v1338
    %v1704 = vunpack.c.l.b16 %v1339
    %v1705 = vunpack.c.h.b16 %v1339
    %v1706 = vunpack.c.l.b16 %v1340
    %v1707 = vunpack.c.h.b16 %v1340
    %v1708 = vunpack.c.l.b16 %v1341
    %v1709 = vunpack.c.h.b16 %v1341
    %v1710 = vunpack.c.l.b16 %v1342
    %v1711 = vunpack.c.l.b16 %v1343
    %v1712 = vunpack.c.h.b16 %v1343
    %v1713 = vunpack.c.l.b16 %v1344
    %v1714 = vunpack.c.h.b16 %v1344
    %v1715 = vunpack.c.l.b16 %v1345
    %v1716 = vunpack.c.h.b16 %v1345
    %v1717 = vunpack.c.l.b16 %v1346
    %v1718 = vunpack.c.l.b16 %v1347
    %v1719 = vunpack.c.h.b16 %v1347
    %v1720 = vunpack.c.l.b16 %v1348
    %v1721 = vunpack.c.h.b16 %v1348
    %v1722 = vunpack.c.l.b16 %v1349
    %v1723 = vunpack.c.h.b16 %v1349
    %v1724 = vunpack.c.l.b16 %v1350
    %v1725 = vunpack.c.l.b16 %v1351
    %v1726 = vunpack.c.h.b16 %v1351
    %v1727 = vunpack.c.l.b16 %v1352
    %v1728 = vunpack.c.h.b16 %v1352
    %v1729 = vunpack.c.l.b16 %v1353
    %v1730 = vunpack.c.h.b16 %v1353
    %v1731 = vunpack.c.l.b16 %v1354
    %v1732 = vunpack.c.l.b16 %v1355
    %v1733 = vunpack.c.h.b16 %v1355
    %v1734 = vunpack.c.l.b16 %v1356
    %v1735 = vunpack.c.h.b16 %v1356
    %v1736 = vunpack.c.l.b16 %v1357
    %v1737 = vunpack.c.h.b16 %v1357
    %v1738 = vunpack.c.l.b16 %v1358
    %v1739 = vunpack.c.l.b16 %v1359
    %v1740 = vunpack.c.h.b16 %v1359
    %v1741 = vunpack.c.l.b16 %v1360
    %v1742 = vunpack.c.h.b16 %v1360
    %v1743 = vunpack.c.l.b16 %v1361
    %v1744 = vunpack.c.h.b16 %v1361
    %v1745 = vunpack.c.l.b16 %v1362
    %v1746 = vunpack.c.l.b16 %v1363
    %v1747 = vunpack.c.h.b16 %v1363
    %v1748 = vunpack.c.l.b16 %v1364
    %v1749 = vunpack.c.h.b16 %v1364
    %v1750 = vunpack.c.l.b16 %v1365
    %v1751 = vunpack.c.h.b16 %v1365
    %v1752 = vunpack.c.l.b16 %v1366
    %v1753 = vunpack.c.l.b16 %v1367
    %v1754 = vunpack.c.h.b16 %v1367
    %v1755 = vunpack.c.l.b16 %v1368
    %v1756 = vunpack.c.h.b16 %v1368
    %v1757 = vunpack.c.l.b16 %v1369
    %v1758 = vunpack.c.h.b16 %v1369
    %v1759 = vunpack.c.l.b16 %v1370
    %v1760 = vpack.c.b16 %v1543, %v1536
    %v1761 = vpack.c.b16 %v1544, %v1537
    %v1762 = vpack.c.b16 %v1545, %v1538
    %v1763 = vpack.c.b16 %v1546, %v1539
    %v1764 = vpack.c.b16 %v1547, %v1540
    %v1765 = vpack.c.b16 %v1548, %v1541
    %v1766 = vpack.c.b16 %v1549, %v1542
    %v1767 = vpack.c.b16 %v1557, %v1550
    %v1768 = vpack.c.b16 %v1558, %v1551
    %v1769 = vpack.c.b16 %v1559, %v1552
    %v1770 = vpack.c.b16 %v1560, %v1553
    %v1771 = vpack.c.b16 %v1561, %v1554
    %v1772 = vpack.c.b16 %v1562, %v1555
    %v1773 = vpack.c.b16 %v1563, %v1556
    %v1774 = vpack.c.b16 %v1571, %v1564
    %v1775 = vpack.c.b16 %v1572, %v1565
    %v1776 = vpack.c.b16 %v1573, %v1566
    %v1777 = vpack.c.b16 %v1574, %v1567
    %v1778 = vpack.c.b16 %v1575, %v1568
    %v1779 = vpack.c.b16 %v1576, %v1569
    %v1780 = vpack.c.b16 %v1577, %v1570
    %v1781 = vpack.c.b16 %v1585, %v1578
    %v1782 = vpack.c.b16 %v1586, %v1579
    %v1783 = vpack.c.b16 %v1587, %v1580
    %v1784 = vpack.c.b16 %v1588, %v1581
    %v1785 = vpack.c.b16 %v1589, %v1582
    %v1786 = vpack.c.b16 %v1590, %v1583
    %v1787 = vpack.c.b16 %v1591, %v1584
    %v1788 = vpack.c.b16 %v1599, %v1592
    %v1789 = vpack.c.b16 %v1600, %v1593
    %v1790 = vpack.c.b16 %v1601, %v1594
    %v1791 = vpack.c.b16 %v1602, %v1595
    %v1792 = vpack.c.b16 %v1603, %v1596
    %v1793 = vpack.c.b16 %v1604, %v1597
    %v1794 = vpack.c.b16 %v1605, %v1598
    %v1795 = vpack.c.b16 %v1613, %v1606
    %v1796 = vpack.c.b16 %v1614, %v1607
    %v1797 = vpack.c.b16 %v1615, %v1608
    %v1798 = vpack.c.b16 %v1616, %v1609
    %v1799 = vpack.c.b16 %v1617, %v1610
    %v1800 = vpack.c.b16 %v1618, %v1611
    %v1801 = vpack.c.b16 %v1619, %v1612
    %v1802 = vpack.c.b16 %v1627, %v1620
    %v1803 = vpack.c.b16 %v1628, %v1621
    %v1804 = vpack.c.b16 %v1629, %v1622
    %v1805 = vpack.c.b16 %v1630, %v1623
    %v1806 = vpack.c.b16 %v1631, %v1624
    %v1807 = vpack.c.b16 %v1632, %v1625
    %v1808 = vpack.c.b16 %v1633, %v1626
    %v1809 = vpack.c.b16 %v1641, %v1634
    %v1810 = vpack.c.b16 %v1642, %v1635
    %v1811 = vpack.c.b16 %v1643, %v1636
    %v1812 = vpack.c.b16 %v1644, %v1637
    %v1813 = vpack.c.b16 %v1645, %v1638
    %v1814 = vpack.c.b16 %v1646, %v1639
    %v1815 = vpack.c.b16 %v1647, %v1640
    %v1816 = vpack.c.b16 %v1655, %v1648
    %v1817 = vpack.c.b16 %v1656, %v1649
    %v1818 = vpack.c.b16 %v1657, %v1650
    %v1819 = vpack.c.b16 %v1658, %v1651
    %v1820 = vpack.c.b16 %v1659, %v1652
    %v1821 = vpack.c.b16 %v1660, %v1653
    %v1822 = vpack.c.b16 %v1661, %v1654
    %v1823 = vpack.c.b16 %v1669, %v1662
    %v1824 = vpack.c.b16 %v1670, %v1663
    %v1825 = vpack.c.b16 %v1671, %v1664
    %v1826 = vpack.c.b16 %v1672, %v1665
    %v1827 = vpack.c.b16 %v1673, %v1666
    %v1828 = vpack.c.b16 %v1674, %v1667
    %v1829 = vpack.c.b16 %v1675, %v1668
    %v1830 = vpack.c.b16 %v1683, %v1676
    %v1831 = vpack.c.b16 %v1684, %v1677
    %v1832 = vpack.c.b16 %v1685, %v1678
    %v1833 = vpack.c.b16 %v1686, %v1679
    %v1834 = vpack.c.b16 %v1687, %v1680
    %v1835 = vpack.c.b16 %v1688, %v1681
    %v1836 = vpack.c.b16 %v1689, %v1682
    %v1837 = vpack.c.b16 %v1697, %v1690
    %v1838 = vpack.c.b16 %v1698, %v1691
    %v1839 = vpack.c.b16 %v1699, %v1692
    %v1840 = vpack.c.b16 %v1700, %v1693
    %v1841 = vpack.c.b16 %v1701, %v1694
    %v1842 = vpack.c.b16 %v1702, %v1695
    %v1843 = vpack.c.b16 %v1703, %v1696
    %v1844 = vpack.c.b16 %v1711, %v1704
    %v1845 = vpack.c.b16 %v1712, %v1705
    %v1846 = vpack.c.b16 %v1713, %v1706
    %v1847 = vpack.c.b16 %v1714, %v1707
    %v1848 = vpack.c.b16 %v1715, %v1708
    %v1849 = vpack.c.b16 %v1716, %v1709
    %v1850 = vpack.c.b16 %v1717, %v1710
    %v1851 = vpack.c.b16 %v1725, %v1718
    %v1852 = vpack.c.b16 %v1726, %v1719
    %v1853 = vpack.c.b16 %v1727, %v1720
    %v1854 = vpack.c.b16 %v1728, %v1721
    %v1855 = vpack.c.b16 %v1729, %v1722
    %v1856 = vpack.c.b16 %v1730, %v1723
    %v1857 = vpack.c.b16 %v1731, %v1724
    %v1858 = vpack.c.b16 %v1739, %v1732
    %v1859 = vpack.c.b16 %v1740, %v1733
    %v1860 = vpack.c.b16 %v1741, %v1734
    %v1861 = vpack.c.b16 %v1742, %v1735
    %v1862 = vpack.c.b16 %v1743, %v1736
    %v1863 = vpack.c.b16 %v1744, %v1737
    %v1864 = vpack.c.b16 %v1745, %v1738
    %v1865 = vpack.c.b16 %v1753, %v1746
    %v1866 = vpack.c.b16 %v1754, %v1747
    %v1867 = vpack.c.b16 %v1755, %v1748
    %v1868 = vpack.c.b16 %v1756, %v1749
    %v1869 = vpack.c.b16 %v1757, %v1750
    %v1870 = vpack.c.b16 %v1758, %v1751
    %v1871 = vpack.c.b16 %v1759, %v1752
    %1984 = vmatprep.subr.bf16.mxu0 %v1761
    %1985 = vmatpush1.bf16.msra.mxu0 %v1760
    %1986 = vmatprep.subr.bf16.mxu0 %v1768
    %1987 = vmatpush1.bf16.msra.mxu0 %v1767
    %1988 = vmatprep.subr.bf16.mxu0 %v1775
    %1989 = vmatpush1.bf16.msra.mxu0 %v1774
    %1990 = vmatprep.subr.bf16.mxu0 %v1782
    %1991 = vmatpush1.bf16.msra.mxu0 %v1781
    %1992 = vmatprep.subr.bf16.mxu0 %v1789
    %1993 = vmatpush1.bf16.msra.mxu0 %v1788
    %1994 = vmatprep.subr.bf16.mxu0 %v1796
    %1995 = vmatpush1.bf16.msra.mxu0 %v1795
    %1996 = vmatprep.subr.bf16.mxu0 %v1803
    %1997 = vmatpush1.bf16.msra.mxu0 %v1802
    %1998 = vmatprep.subr.bf16.mxu0 %v1810
    %1999 = vmatpush1.bf16.msra.mxu0 %v1809
    %2000 = vmatprep.subr.bf16.mxu0 %v1817
    %2001 = vmatpush1.bf16.msra.mxu0 %v1816
    %2002 = vmatprep.subr.bf16.mxu0 %v1824
    %2003 = vmatpush1.bf16.msra.mxu0 %v1823
    %2004 = vmatprep.subr.bf16.mxu0 %v1831
    %2005 = vmatpush1.bf16.msra.mxu0 %v1830
    %2006 = vmatprep.subr.bf16.mxu0 %v1838
    %2007 = vmatpush1.bf16.msra.mxu0 %v1837
    %2008 = vmatprep.subr.bf16.mxu0 %v1845
    %2009 = vmatpush1.bf16.msra.mxu0 %v1844
    %2010 = vmatprep.subr.bf16.mxu0 %v1852
    %2011 = vmatpush1.bf16.msra.mxu0 %v1851
    %2012 = vmatprep.subr.bf16.mxu0 %v1859
    %2013 = vmatpush1.bf16.msra.mxu0 %v1858
    %2014 = vmatprep.subr.bf16.mxu0 %v1866
    %2015 = vmatpush1.bf16.msra.mxu0 %v1865
    %2016 = vmatprep.mubr.bf16.mxu0 %v1242
    %2017 = vmatmul.mubr.bf16.gmra.mrb[0].mxu0 %v1241
    %v2018 = vpop.f32.mrb[0].mxu0
    %v2019 = vadd.f32 %v1376, %v2018
    %v2020 = vpop.f32.mrb[0].mxu0
    %v2021 = vadd.f32 %v1380, %v2020
    %v2022 = vpop.f32.mrb[0].mxu0
    %v2023 = vpop.f32.mrb[0].mxu0
    %2024 = vdwg.mxu0
    %2025 = vmatprep.subr.bf16.mxu0 %v1763
    %2026 = vmatpush1.bf16.msra.mxu0 %v1762
    %2027 = vmatprep.subr.bf16.mxu0 %v1770
    %2028 = vmatpush1.bf16.msra.mxu0 %v1769
    %2029 = vmatprep.subr.bf16.mxu0 %v1777
    %2030 = vmatpush1.bf16.msra.mxu0 %v1776
    %2031 = vmatprep.subr.bf16.mxu0 %v1784
    %2032 = vmatpush1.bf16.msra.mxu0 %v1783
    %2033 = vmatprep.subr.bf16.mxu0 %v1791
    %2034 = vmatpush1.bf16.msra.mxu0 %v1790
    %2035 = vmatprep.subr.bf16.mxu0 %v1798
    %2036 = vmatpush1.bf16.msra.mxu0 %v1797
    %2037 = vmatprep.subr.bf16.mxu0 %v1805
    %2038 = vmatpush1.bf16.msra.mxu0 %v1804
    %2039 = vmatprep.subr.bf16.mxu0 %v1812
    %2040 = vmatpush1.bf16.msra.mxu0 %v1811
    %2041 = vmatprep.subr.bf16.mxu0 %v1819
    %2042 = vmatpush1.bf16.msra.mxu0 %v1818
    %2043 = vmatprep.subr.bf16.mxu0 %v1826
    %2044 = vmatpush1.bf16.msra.mxu0 %v1825
    %2045 = vmatprep.subr.bf16.mxu0 %v1833
    %2046 = vmatpush1.bf16.msra.mxu0 %v1832
    %2047 = vmatprep.subr.bf16.mxu0 %v1840
    %2048 = vmatpush1.bf16.msra.mxu0 %v1839
    %2049 = vmatprep.subr.bf16.mxu0 %v1847
    %2050 = vmatpush1.bf16.msra.mxu0 %v1846
    %2051 = vmatprep.subr.bf16.mxu0 %v1854
    %2052 = vmatpush1.bf16.msra.mxu0 %v1853
    %2053 = vmatprep.subr.bf16.mxu0 %v1861
    %2054 = vmatpush1.bf16.msra.mxu0 %v1860
    %2055 = vmatprep.subr.bf16.mxu0 %v1868
    %2056 = vmatpush1.bf16.msra.mxu0 %v1867
    %2057 = vmatprep.mubr.bf16.mxu0 %v1242
    %2058 = vmatmul.mubr.bf16.gmra.mrb[0].mxu0 %v1241
    %v2059 = vpop.f32.mrb[0].mxu0
    %v2060 = vadd.f32 %v1384, %v2059
    %v2061 = vpop.f32.mrb[0].mxu0
    %v2062 = vadd.f32 %v1388, %v2061
    %v2063 = vpop.f32.mrb[0].mxu0
    %v2064 = vpop.f32.mrb[0].mxu0
    %2065 = vdwg.mxu0
    %2066 = vmatprep.subr.bf16.mxu0 %v1765
    %2067 = vmatpush1.bf16.msra.mxu0 %v1764
    %2068 = vmatprep.subr.bf16.mxu0 %v1772
    %2069 = vmatpush1.bf16.msra.mxu0 %v1771
    %2070 = vmatprep.subr.bf16.mxu0 %v1779
    %2071 = vmatpush1.bf16.msra.mxu0 %v1778
    %2072 = vmatprep.subr.bf16.mxu0 %v1786
    %2073 = vmatpush1.bf16.msra.mxu0 %v1785
    %2074 = vmatprep.subr.bf16.mxu0 %v1793
    %2075 = vmatpush1.bf16.msra.mxu0 %v1792
    %2076 = vmatprep.subr.bf16.mxu0 %v1800
    %2077 = vmatpush1.bf16.msra.mxu0 %v1799
    %2078 = vmatprep.subr.bf16.mxu0 %v1807
    %2079 = vmatpush1.bf16.msra.mxu0 %v1806
    %2080 = vmatprep.subr.bf16.mxu0 %v1814
    %2081 = vmatpush1.bf16.msra.mxu0 %v1813
    %2082 = vmatprep.subr.bf16.mxu0 %v1821
    %2083 = vmatpush1.bf16.msra.mxu0 %v1820
    %2084 = vmatprep.subr.bf16.mxu0 %v1828
    %2085 = vmatpush1.bf16.msra.mxu0 %v1827
    %2086 = vmatprep.subr.bf16.mxu0 %v1835
    %2087 = vmatpush1.bf16.msra.mxu0 %v1834
    %2088 = vmatprep.subr.bf16.mxu0 %v1842
    %2089 = vmatpush1.bf16.msra.mxu0 %v1841
    %2090 = vmatprep.subr.bf16.mxu0 %v1849
    %2091 = vmatpush1.bf16.msra.mxu0 %v1848
    %2092 = vmatprep.subr.bf16.mxu0 %v1856
    %2093 = vmatpush1.bf16.msra.mxu0 %v1855
    %2094 = vmatprep.subr.bf16.mxu0 %v1863
    %2095 = vmatpush1.bf16.msra.mxu0 %v1862
    %2096 = vmatprep.subr.bf16.mxu0 %v1870
    %2097 = vmatpush1.bf16.msra.mxu0 %v1869
    %2098 = vmatprep.mubr.bf16.mxu0 %v1242
    %2099 = vmatmul.mubr.bf16.gmra.mrb[0].mxu0 %v1241
    %v2100 = vpop.f32.mrb[0].mxu0
    %v2101 = vadd.f32 %v1392, %v2100
    %v2102 = vpop.f32.mrb[0].mxu0
    %v2103 = vadd.f32 %v1396, %v2102
    %v2104 = vpop.f32.mrb[0].mxu0
    %v2105 = vpop.f32.mrb[0].mxu0
    %2106 = vdwg.mxu0
    %2107 = vmatprep.subr.bf16.mxu0 0
    %2108 = vmatpush1.bf16.msra.mxu0 %v1766
    %2109 = vmatprep.subr.bf16.mxu0 0
    %2110 = vmatpush1.bf16.msra.mxu0 %v1773
    %2111 = vmatprep.subr.bf16.mxu0 0
    %2112 = vmatpush1.bf16.msra.mxu0 %v1780
    %2113 = vmatprep.subr.bf16.mxu0 0
    %2114 = vmatpush1.bf16.msra.mxu0 %v1787
    %2115 = vmatprep.subr.bf16.mxu0 0
    %2116 = vmatpush1.bf16.msra.mxu0 %v1794
    %2117 = vmatprep.subr.bf16.mxu0 0
    %2118 = vmatpush1.bf16.msra.mxu0 %v1801
    %2119 = vmatprep.subr.bf16.mxu0 0
    %2120 = vmatpush1.bf16.msra.mxu0 %v1808
    %2121 = vmatprep.subr.bf16.mxu0 0
    %2122 = vmatpush1.bf16.msra.mxu0 %v1815
    %2123 = vmatprep.subr.bf16.mxu0 0
    %2124 = vmatpush1.bf16.msra.mxu0 %v1822
    %2125 = vmatprep.subr.bf16.mxu0 0
    %2126 = vmatpush1.bf16.msra.mxu0 %v1829
    %2127 = vmatprep.subr.bf16.mxu0 0
    %2128 = vmatpush1.bf16.msra.mxu0 %v1836
    %2129 = vmatprep.subr.bf16.mxu0 0
    %2130 = vmatpush1.bf16.msra.mxu0 %v1843
    %2131 = vmatprep.subr.bf16.mxu0 0
    %2132 = vmatpush1.bf16.msra.mxu0 %v1850
    %2133 = vmatprep.subr.bf16.mxu0 0
    %2134 = vmatpush1.bf16.msra.mxu0 %v1857
    %2135 = vmatprep.subr.bf16.mxu0 0
    %2136 = vmatpush1.bf16.msra.mxu0 %v1864
    %2137 = vmatprep.subr.bf16.mxu0 0
    %2138 = vmatpush1.bf16.msra.mxu0 %v1871
    %2139 = vmatprep.mubr.bf16.mxu0 %v1242
    %2140 = vmatmul.mubr.bf16.gmra.mrb[0].mxu0 %v1241
    %v2141 = vpop.f32.mrb[0].mxu0
    %v2142 = vadd.f32 %v1400, %v2141
    %v2143 = vpop.f32.mrb[0].mxu0
    %v2144 = vpop.f32.mrb[0].mxu0
    %v2145 = vpop.f32.mrb[0].mxu0
    %2146 = vdwg.mxu0
    %v2147 = vtanh.pop %v2019
    %v2148 = vtanh.pop %v2021
    %v2149 = vtanh.pop %v2060
    %v2150 = vtanh.pop %v2062
    %v2151 = vtanh.pop %v2101
    %v2152 = vtanh.pop %v2103
    %v2153 = vtanh.pop %v2142
    %2154 = vst [vmem:[#allocation8] sm:$0xff] %v2147
    %2155 = vst [vmem:[#allocation8 + $0x8] sm:$0xff] %v2148
    %2156 = vst [vmem:[#allocation8 + $0x10] sm:$0xff] %v2149
    %2157 = vst [vmem:[#allocation8 + $0x18] sm:$0xff] %v2150
    %2158 = vst [vmem:[#allocation8 + $0x20] sm:$0xff] %v2151
    %2159 = vst [vmem:[#allocation8 + $0x28] sm:$0xff] %v2152
    %2160 = vst [vmem:[#allocation8 + $0x30] sm:$0xff] %v2153
    // Predicated region
    $region38: #{_generator_forward_impl.1} parent=1 // pred_check
      _
    $region39: #{_generator_forward_impl.1} parent=1 // pred_check_branch
      %2162 = sbr.rel (0) target = $region41
    $region40: #{_generator_forward_impl.1} parent=1 // pred_region
      %s2164 = ssub.s32 896, 896
      %2165 = vsyncadd [#allocation4], %s2164
      %s2167 = sshll.u32 [#allocation8], 4
      %s2168 = int_to_ptr.vmem [resolvable:$true] %s2167
      %2170 = dma.vmem_to_hbm [thread:$0]  %s2168, 896, %s6, [#allocation4]
    $region41: #{_generator_forward_impl.1} parent=1 // pred_fallthru
      _
    // Predicated region
    $region42: #{_generator_forward_impl.1} parent=1 // pred_check
      _
    $region43: #{_generator_forward_impl.1} parent=1 // pred_check_branch
      %2172 = sbr.rel (0) target = $region45
    $region44: #{_generator_forward_impl.1} parent=1 // pred_region
      %2173 = dma.done [#allocation4], 896
    $region45: #{_generator_forward_impl.1} parent=1 // pred_fallthru
      _
    %2174 = vsyncpa [#allocation3], 1
    %2175 = vsyncpa [#allocation6], 1
    %2176 = vsyncpa [#allocation4], 1

</llo_original>
